<compile_context>
chip_gen: v7x
topology: tpu7x:2x2x1
jax: 0.10.0
libtpu: 0.0.40
codegen_flags: <defaults>
</compile_context>

<pallas_src>
import jax
import jax.numpy as jnp
from jax.experimental import pallas as pl
from jax.experimental.pallas import tpu as pltpu


def _round_up(x, m):
    return (x + m - 1) // m * m


def wsddn_head_kernel(x_ref, w1_ref, b1_ref, w2_ref, b2_ref, wc_ref, bc_ref,
                      out_ref, acc_ref):
    """One (tile_n, tile_k) step of the fc1 reduction; on the last K step the
    full MLP tail runs and the fused, lane-dense cls output is stored."""
    k = pl.program_id(1)

    @pl.when(k == 0)
    def _init():
        acc_ref[...] = jnp.zeros_like(acc_ref)

    # fc1: stream (tile_k, H) bf16 weight slabs, accumulate in f32 on the MXU.
    acc_ref[...] += jnp.dot(x_ref[...], w1_ref[...],
                            preferred_element_type=jnp.float32)

    @pl.when(k == pl.num_programs(1) - 1)
    def _finalize():
        # fc1 bias + ReLU in f32 (dropout1 == identity), bf16 for next MXU pass.
        h = jnp.maximum(acc_ref[...] + b1_ref[...], 0.0).astype(jnp.bfloat16)
        # fc2 + ReLU (dropout2 == identity).
        h = jnp.dot(h, w2_ref[...], preferred_element_type=jnp.float32) + b2_ref[...]
        h = jnp.maximum(h, 0.0).astype(jnp.bfloat16)
        # Fused classification heads: one matmul, one lane-dense (TN, Cpad) store.
        out_ref[...] = (jnp.dot(h, wc_ref[...], preferred_element_type=jnp.float32)
                        + bc_ref[...])


def wsddn_head_forward(x, params, *, tile_n=128, tile_k=512):
    """x: (N, C, Hf, Wf) float32 NCHW.  Returns (cls1, cls2), each (N, num_classes) f32."""
    n = x.shape[0]
    x_flat = x.reshape(n, -1)                       # matches torch x.view(N, -1)
    d = x_flat.shape[1]
    hidden = params["fc1_w"].shape[0]
    num_classes = params["fc_cls1_w"].shape[0]

    # ----- tiling / padding (ragged N and D handled with zero pads) ---------
    tile_k = min(tile_k, _round_up(d, 128))
    n_pad = _round_up(n, tile_n)
    d_pad = _round_up(d, tile_k)
    c2 = 2 * num_classes
    c_pad = _round_up(c2, 128)                      # lane-dense fused cls width

    # ----- operand prep: bf16 matmul operands, f32 biases --------------------
    xb = jnp.pad(x_flat, ((0, n_pad - n), (0, d_pad - d))).astype(jnp.bfloat16)
    # PyTorch Linear stores W as (out, in); kernel computes y = x @ W^T + b.
    w1 = jnp.pad(params["fc1_w"].T, ((0, d_pad - d), (0, 0))).astype(jnp.bfloat16)
    w2 = params["fc2_w"].T.astype(jnp.bfloat16)
    wc = jnp.pad(
        jnp.concatenate([params["fc_cls1_w"].T, params["fc_cls2_w"].T], axis=1),
        ((0, 0), (0, c_pad - c2))).astype(jnp.bfloat16)
    b1 = params["fc1_b"].reshape(1, -1).astype(jnp.float32)
    b2 = params["fc2_b"].reshape(1, -1).astype(jnp.float32)
    bc = jnp.pad(
        jnp.concatenate([params["fc_cls1_b"], params["fc_cls2_b"]]).reshape(1, -1),
        ((0, 0), (0, c_pad - c2))).astype(jnp.float32)

    grid = (n_pad // tile_n, d_pad // tile_k)
    const = lambda shape: pl.BlockSpec(shape, lambda i, k: (0, 0))

    out = pl.pallas_call(
        wsddn_head_kernel,
        out_shape=jax.ShapeDtypeStruct((n_pad, c_pad), jnp.float32),
        grid_spec=pltpu.PrefetchScalarGridSpec(
            num_scalar_prefetch=0,
            grid=grid,
            in_specs=[
                pl.BlockSpec((tile_n, tile_k), lambda i, k: (i, k)),   # x tile
                pl.BlockSpec((tile_k, hidden), lambda i, k: (k, 0)),   # fc1 W slab
                const((1, hidden)),                                    # fc1 b
                const((hidden, hidden)),                               # fc2 W
                const((1, hidden)),                                    # fc2 b
                const((hidden, c_pad)),                                # fused cls W
                const((1, c_pad)),                                     # fused cls b
            ],
            out_specs=pl.BlockSpec((tile_n, c_pad), lambda i, k: (i, 0)),
            scratch_shapes=[pltpu.VMEM((tile_n, hidden), jnp.float32)],
        ),
        compiler_params=pltpu.CompilerParams(
            dimension_semantics=("parallel", "arbitrary"),
            vmem_limit_bytes=32 * 1024 * 1024,
        ),
    )(xb, w1, b1, w2, b2, wc, bc)

    cls1 = out[:n, :num_classes]
    cls2 = out[:n, num_classes:c2]
    return cls1, cls2


def init_params(key, in_channels, roi_feat_size, hidden_channels, num_classes):
    """normal(0, 0.01) weights as in WSDDNHead.init_weights; small non-zero
    biases so the bias-add path is exercised by the self-test."""
    roi_area = roi_feat_size * roi_feat_size
    d = in_channels * roi_area
    ks = jax.random.split(key, 8)
    std = 0.01
    return {
        "fc1_w": std * jax.random.normal(ks[0], (hidden_channels, d), jnp.float32),
        "fc1_b": std * jax.random.normal(ks[1], (hidden_channels,), jnp.float32),
        "fc2_w": std * jax.random.normal(ks[2], (hidden_channels, hidden_channels), jnp.float32),
        "fc2_b": std * jax.random.normal(ks[3], (hidden_channels,), jnp.float32),
        "fc_cls1_w": std * jax.random.normal(ks[4], (num_classes, hidden_channels), jnp.float32),
        "fc_cls1_b": std * jax.random.normal(ks[5], (num_classes,), jnp.float32),
        "fc_cls2_w": std * jax.random.normal(ks[6], (num_classes, hidden_channels), jnp.float32),
        "fc_cls2_b": std * jax.random.normal(ks[7], (num_classes,), jnp.float32),
    }


def reference_forward(x, params):
    """Pure-JAX f32 reference of the PyTorch forward (dropout = identity)."""
    xf = x.reshape(x.shape[0], -1)
    h = jnp.maximum(xf @ params["fc1_w"].T + params["fc1_b"], 0.0)
    h = jnp.maximum(h @ params["fc2_w"].T + params["fc2_b"], 0.0)
    cls1 = h @ params["fc_cls1_w"].T + params["fc_cls1_b"]
    cls2 = h @ params["fc_cls2_w"].T + params["fc_cls2_b"]
    return cls1, cls2


if __name__ == "__main__":
    # Small shapes consistent with the module:
    #   roi_feat_size=4, in_channels=16 -> flattened D = 16*4*4 = 256
    #   hidden_channels=256, num_classes=8
    #   n_rois=200 (not a multiple of tile_n -> exercises the padded last tile)
    roi_feat_size = 4
    in_channels = 16
    hidden_channels = 256
    num_classes = 8
    n_rois = 200

    key = jax.random.PRNGKey(0)
    kx, kp = jax.random.split(key)
    x = jax.random.normal(
        kx, (n_rois, in_channels, roi_feat_size, roi_feat_size), jnp.float32)
    params = init_params(kp, in_channels, roi_feat_size, hidden_channels, num_classes)

    # tile_k=128 -> two K steps over D=256, exercising the streamed fc1 reduction.
    cls1, cls2 = wsddn_head_forward(x, params, tile_n=128, tile_k=128)
    cls1 = jax.block_until_ready(cls1)
    cls2 = jax.block_until_ready(cls2)

    ref1, ref2 = reference_forward(x, params)
    assert cls1.shape == (n_rois, num_classes) and cls2.shape == (n_rois, num_classes)
    # bf16 matmuls with f32 accumulation -> loosened tolerance vs. the f32 ref.
    assert jnp.allclose(cls1, ref1, atol=1e-3, rtol=2e-2), \
        float(jnp.max(jnp.abs(cls1 - ref1)))
    assert jnp.allclose(cls2, ref2, atol=1e-3, rtol=2e-2), \
        float(jnp.max(jnp.abs(cls2 - ref2)))

    print("KERNEL_OK")
</pallas_src>

<mosaic_0001>
module attributes {stable_mosaic.version = 11 : i64} {
  func.func @wsddn_head_kernel(%arg0: i32, %arg1: i32, %arg2: memref<128x128xbf16, #tpu.memory_space<vmem>>, %arg3: memref<128x256xbf16, #tpu.memory_space<vmem>>, %arg4: memref<1x256xf32, #tpu.memory_space<vmem>>, %arg5: memref<256x256xbf16, #tpu.memory_space<vmem>>, %arg6: memref<1x256xf32, #tpu.memory_space<vmem>>, %arg7: memref<256x128xbf16, #tpu.memory_space<vmem>>, %arg8: memref<1x128xf32, #tpu.memory_space<vmem>>, %arg9: memref<128x128xf32, #tpu.memory_space<vmem>>, %arg10: memref<128x256xf32, #tpu.memory_space<vmem>>) attributes {dimension_semantics = [#tpu.dimension_semantics<parallel>, #tpu.dimension_semantics<arbitrary>], iteration_bounds = array<i64: 2, 2>, scalar_prefetch = 0 : i64, scratch_operands = 1 : i64, tpu.core_type = #tpu.core_type<tc>, window_params = [{transform_indices = @transform_0, window_bounds = array<i64: 128, 128>}, {transform_indices = @transform_1, window_bounds = array<i64: 128, 256>}, {pipeline_mode = #tpu.pipeline_mode<synchronous>, transform_indices = @transform_2, window_bounds = array<i64: 1, 256>}, {pipeline_mode = #tpu.pipeline_mode<synchronous>, transform_indices = @transform_3, window_bounds = array<i64: 256, 256>}, {pipeline_mode = #tpu.pipeline_mode<synchronous>, transform_indices = @transform_4, window_bounds = array<i64: 1, 256>}, {pipeline_mode = #tpu.pipeline_mode<synchronous>, transform_indices = @transform_5, window_bounds = array<i64: 256, 128>}, {pipeline_mode = #tpu.pipeline_mode<synchronous>, transform_indices = @transform_6, window_bounds = array<i64: 1, 128>}, {transform_indices = @transform_7, window_bounds = array<i64: 128, 128>}]} {
    %c0_i32 = arith.constant 0 : i32
    %0 = arith.cmpi eq, %arg1, %c0_i32 : i32
    %1 = arith.extui %0 : i1 to i32
    %c0_i32_0 = arith.constant 0 : i32
    %2 = arith.cmpi ne, %1, %c0_i32_0 : i32
    scf.if %2 {
      %cst_9 = arith.constant 0.000000e+00 : f32
      %12 = vector.broadcast %cst_9 : f32 to vector<128x256xf32>
      %c0_10 = arith.constant 0 : index
      %c0_11 = arith.constant 0 : index
      %13 = vector.load %arg10[%c0_10, %c0_11] : memref<128x256xf32, #tpu.memory_space<vmem>>, vector<128x256xf32>
      tpu.vector_store %arg10[%c0_10, %c0_11], %12 {strides = array<i32>} : memref<128x256xf32, #tpu.memory_space<vmem>>, vector<128x256xf32>,
    } else {
    }
    %c0 = arith.constant 0 : index
    %c0_1 = arith.constant 0 : index
    %3 = vector.load %arg10[%c0, %c0_1] : memref<128x256xf32, #tpu.memory_space<vmem>>, vector<128x256xf32>
    %c0_2 = arith.constant 0 : index
    %c0_3 = arith.constant 0 : index
    %4 = vector.load %arg2[%c0_2, %c0_3] : memref<128x128xbf16, #tpu.memory_space<vmem>>, vector<128x128xbf16>
    %c0_4 = arith.constant 0 : index
    %c0_5 = arith.constant 0 : index
    %5 = vector.load %arg3[%c0_4, %c0_5] : memref<128x256xbf16, #tpu.memory_space<vmem>>, vector<128x256xbf16>
    %cst = arith.constant dense<0.000000e+00> : vector<128x256xf32>
    %6 = tpu.matmul %4, %5, %cst {dimension_numbers = #tpu.dot_dimension_numbers<[1], [0], [0], [1], [0, 0, 1, 1], [], []>} : vector<128x128xbf16>, vector<128x256xbf16>, vector<128x256xf32> -> vector<128x256xf32>
    %7 = arith.addf %3, %6 : vector<128x256xf32>
    %c0_6 = arith.constant 0 : index
    %c0_7 = arith.constant 0 : index
    %8 = vector.load %arg10[%c0_6, %c0_7] : memref<128x256xf32, #tpu.memory_space<vmem>>, vector<128x256xf32>
    tpu.vector_store %arg10[%c0_6, %c0_7], %7 {strides = array<i32>} : memref<128x256xf32, #tpu.memory_space<vmem>>, vector<128x256xf32>,
    %c1_i32 = arith.constant 1 : i32
    %9 = arith.cmpi eq, %arg1, %c1_i32 : i32
    %10 = arith.extui %9 : i1 to i32
    %c0_i32_8 = arith.constant 0 : i32
    %11 = arith.cmpi ne, %10, %c0_i32_8 : i32
    scf.if %11 {
      %c0_9 = arith.constant 0 : index
      %c0_10 = arith.constant 0 : index
      %12 = vector.load %arg10[%c0_9, %c0_10] : memref<128x256xf32, #tpu.memory_space<vmem>>, vector<128x256xf32>
      %c0_11 = arith.constant 0 : index
      %c0_12 = arith.constant 0 : index
      %13 = vector.load %arg4[%c0_11, %c0_12] : memref<1x256xf32, #tpu.memory_space<vmem>>, vector<1x256xf32>
      %14 = vector.broadcast %13 : vector<1x256xf32> to vector<128x256xf32>
      %15 = arith.addf %12, %14 : vector<128x256xf32>
      %cst_13 = arith.constant 0.000000e+00 : f32
      %16 = vector.broadcast %cst_13 : f32 to vector<128x256xf32>
      %17 = arith.maximumf %15, %16 : vector<128x256xf32>
      %18 = arith.truncf %17 : vector<128x256xf32> to vector<128x256xbf16>
      %c0_14 = arith.constant 0 : index
      %c0_15 = arith.constant 0 : index
      %19 = vector.load %arg5[%c0_14, %c0_15] : memref<256x256xbf16, #tpu.memory_space<vmem>>, vector<256x256xbf16>
      %cst_16 = arith.constant dense<0.000000e+00> : vector<128x256xf32>
      %20 = tpu.matmul %18, %19, %cst_16 {dimension_numbers = #tpu.dot_dimension_numbers<[1], [0], [0], [1], [0, 0, 1, 1], [], []>} : vector<128x256xbf16>, vector<256x256xbf16>, vector<128x256xf32> -> vector<128x256xf32>
      %c0_17 = arith.constant 0 : index
      %c0_18 = arith.constant 0 : index
      %21 = vector.load %arg6[%c0_17, %c0_18] : memref<1x256xf32, #tpu.memory_space<vmem>>, vector<1x256xf32>
      %22 = vector.broadcast %21 : vector<1x256xf32> to vector<128x256xf32>
      %23 = arith.addf %20, %22 : vector<128x256xf32>
      %cst_19 = arith.constant 0.000000e+00 : f32
      %24 = vector.broadcast %cst_19 : f32 to vector<128x256xf32>
      %25 = arith.maximumf %23, %24 : vector<128x256xf32>
      %26 = arith.truncf %25 : vector<128x256xf32> to vector<128x256xbf16>
      %c0_20 = arith.constant 0 : index
      %c0_21 = arith.constant 0 : index
      %27 = vector.load %arg7[%c0_20, %c0_21] : memref<256x128xbf16, #tpu.memory_space<vmem>>, vector<256x128xbf16>
      %cst_22 = arith.constant dense<0.000000e+00> : vector<128x128xf32>
      %28 = tpu.matmul %26, %27, %cst_22 {dimension_numbers = #tpu.dot_dimension_numbers<[1], [0], [0], [1], [0, 0, 1, 1], [], []>} : vector<128x256xbf16>, vector<256x128xbf16>, vector<128x128xf32> -> vector<128x128xf32>
      %c0_23 = arith.constant 0 : index
      %c0_24 = arith.constant 0 : index
      %29 = vector.load %arg8[%c0_23, %c0_24] : memref<1x128xf32, #tpu.memory_space<vmem>>, vector<1x128xf32>
      %30 = vector.broadcast %29 : vector<1x128xf32> to vector<128x128xf32>
      %31 = arith.addf %28, %30 : vector<128x128xf32>
      %c0_25 = arith.constant 0 : index
      %c0_26 = arith.constant 0 : index
      %32 = vector.load %arg9[%c0_25, %c0_26] : memref<128x128xf32, #tpu.memory_space<vmem>>, vector<128x128xf32>
      tpu.vector_store %arg9[%c0_25, %c0_26], %31 {strides = array<i32>} : memref<128x128xf32, #tpu.memory_space<vmem>>, vector<128x128xf32>,
    } else {
    }
    return
  }
  func.func @transform_0(%arg0: i32, %arg1: i32) -> (i32, i32) {
    %c0_i32 = arith.constant 0 : i32
    return %arg0, %arg1 : i32, i32
  }
  func.func @transform_1(%arg0: i32, %arg1: i32) -> (i32, i32) {
    %c0_i32 = arith.constant 0 : i32
    %c0_i32_0 = arith.constant 0 : i32
    return %arg1, %c0_i32 : i32, i32
  }
  func.func @transform_2(%arg0: i32, %arg1: i32) -> (i32, i32) {
    %c0_i32 = arith.constant 0 : i32
    %c0_i32_0 = arith.constant 0 : i32
    %c0_i32_1 = arith.constant 0 : i32
    return %c0_i32, %c0_i32_0 : i32, i32
  }
  func.func @transform_3(%arg0: i32, %arg1: i32) -> (i32, i32) {
    %c0_i32 = arith.constant 0 : i32
    %c0_i32_0 = arith.constant 0 : i32
    %c0_i32_1 = arith.constant 0 : i32
    return %c0_i32, %c0_i32_0 : i32, i32
  }
  func.func @transform_4(%arg0: i32, %arg1: i32) -> (i32, i32) {
    %c0_i32 = arith.constant 0 : i32
    %c0_i32_0 = arith.constant 0 : i32
    %c0_i32_1 = arith.constant 0 : i32
    return %c0_i32, %c0_i32_0 : i32, i32
  }
  func.func @transform_5(%arg0: i32, %arg1: i32) -> (i32, i32) {
    %c0_i32 = arith.constant 0 : i32
    %c0_i32_0 = arith.constant 0 : i32
    %c0_i32_1 = arith.constant 0 : i32
    return %c0_i32, %c0_i32_0 : i32, i32
  }
  func.func @transform_6(%arg0: i32, %arg1: i32) -> (i32, i32) {
    %c0_i32 = arith.constant 0 : i32
    %c0_i32_0 = arith.constant 0 : i32
    %c0_i32_1 = arith.constant 0 : i32
    return %c0_i32, %c0_i32_0 : i32, i32
  }
  func.func @transform_7(%arg0: i32, %arg1: i32) -> (i32, i32) {
    %c0_i32 = arith.constant 0 : i32
    %c0_i32_0 = arith.constant 0 : i32
    return %arg0, %c0_i32 : i32, i32
  }
}

</mosaic_0001>

<llo_original>
// kernel: tpu_custom_call.1
$region0: #{tpu_custom_call.1}
  #allocation0 [shape = 'u32[]', space=smem, size = 0x4, offset = 0x4, fixed_abs, tag = 'smem constant byte address 0x4 - core index']
  #allocation1 [shape = 'u32[144,128]{1,0:T(1,128)}', space=vmem, size = 0x12000, scoped, tag = 'internal scratch']
  #allocation2 [shape = 'f32[128,256]{1,0:T(8,128)}', space=vmem, size = 0x20000, scoped, tag = 'scratch operand']
  %s0 = inlined_call_operand.hbm [shape: bf16[256,256], index: 0, kind: input, shape index: {}]
  %s1 = inlined_call_operand.hbm [shape: bf16[256,256], index: 1, kind: input, shape index: {}]
  %s2 = inlined_call_operand.vmem [shape: f32[1,256], index: 2, kind: input, shape index: {}]
  %s3 = inlined_call_operand.hbm [shape: bf16[256,256], index: 3, kind: input, shape index: {}]
  %s4 = inlined_call_operand.vmem [shape: f32[1,256], index: 4, kind: input, shape index: {}]
  %s5 = inlined_call_operand.hbm [shape: bf16[256,128], index: 5, kind: input, shape index: {}]
  %s6 = inlined_call_operand.vmem [shape: f32[1,128], index: 6, kind: input, shape index: {}]
  %s7 = inlined_call_operand.hbm [shape: f32[256,128], index: 7, kind: output, shape index: {}]
  %s8 = sld [smem:[#allocation0]]
  $region85: #{tpu_custom_call.1} parent=0
    _
  %s10 = ssub.s32 1, %s8
  %s11 = scalar_select 0, %s10, %s8
  $region1: #{tpu_custom_call.1} parent=0
    #allocation3 [shape = 'u8[65536]{0}', space=vmem, size = 0x10000, scoped, tag = 'input window, operand 0']
    #allocation4 [shape = 's32[2]{0}', space=sflag, size = 0x8, scoped, tag = 'scoped memory for tpu_custom_call.1']
    #allocation5 [shape = 's32[2]{0}', space=sflag, size = 0x8, scoped, tag = 'scoped memory for tpu_custom_call.1']
    #allocation6 [shape = 'u8[131072]{0}', space=vmem, size = 0x20000, scoped, tag = 'input window, operand 1']
    #allocation7 [shape = 's32[2]{0}', space=sflag, size = 0x8, scoped, tag = 'scoped memory for tpu_custom_call.1']
    #allocation8 [shape = 'u8[131072]{0}', space=vmem, size = 0x20000, scoped, tag = 'input window, operand 3, single buffered']
    #allocation9 [shape = 'u8[65536]{0}', space=vmem, size = 0x10000, scoped, tag = 'input window, operand 5, single buffered']
    #allocation10 [shape = 's32[1]{0}', space=sflag, size = 0x4, scoped, tag = 'scoped memory for tpu_custom_call.1']
    #allocation11 [shape = 'u8[131072]{0}', space=vmem, size = 0x20000, scoped, tag = 'output window, operand 0']
    %12 = vsyncpa [#allocation4], 0
    %s13 = scalar_lea.sflag [#allocation4], 1
    %14 = vsyncpa %s13, 0
    %15 = vsyncpa [#allocation7], 0
    %s16 = scalar_lea.sflag [#allocation7], 1
    %17 = vsyncpa %s16, 0
    %18 = vsyncpa [#allocation10], 0
    %19 = vsyncpa [#allocation5], 0
    %s20 = scalar_lea.sflag [#allocation5], 1
    %21 = vsyncpa %s20, 0
    loop: start=0, step=1, limit=6
    $region2: #{tpu_custom_call.1} parent=1 // loop_pre_header
      _
    $region3: #{tpu_custom_call.1} parent=1 // loop_header
      %s23 = sphi 0, %s27
      %p24 = scmp.ge.s32.totalorder %s23, 6
      %s30 = sphi 0, %s42
      %s31 = sphi 0, %s38
      %s32 = sphi 0, %s30
      %s33 = sphi 0, %s31
      %s34 = sphi 0, %s32
      %s35 = sphi 0, %s33
      %s47 = sphi 0, %s49
      %s50 = sphi 0, %s47
      %s51 = sphi 0, %s50
      %s67 = sphi 0, %s51
      %s73 = sphi 0, %s75
      %s76 = sphi 0, %s73
      %s77 = sphi 0, %s76
      %s93 = sphi 0, %s77
      %s97 = sphi 0, %s97
      %s99 = sphi 0, %s97
      %s100 = sphi 0, %s99
      %s114 = sphi 0, %s100
      %s118 = sphi 0, %s118
      %s120 = sphi 0, %s118
      %s121 = sphi 0, %s120
      %s135 = sphi 0, %s121
      %s139 = sphi 0, %s139
      %s141 = sphi 0, %s139
      %s142 = sphi 0, %s141
      %s156 = sphi 0, %s142
      %s160 = sphi 0, %s160
      %s162 = sphi 0, %s160
      %s163 = sphi 0, %s162
      %s177 = sphi 0, %s163
      %s181 = sphi 0, %s181
      %s183 = sphi 0, %s181
      %s184 = sphi 0, %s183
      %s198 = sphi 0, %s184
      %s204 = sphi 0, %s206
      %s207 = sphi 0, %s204
      %s208 = sphi 0, %s207
      %s224 = sphi 0, %s208
    $region4: #{tpu_custom_call.1} parent=1 // loop_header_branch
      %26 = sbr.rel (%p24) target = $region8
    $region5: #{tpu_custom_call.1} parent=1 // loop_body
      %s28 = ssub.s32 %s23, 1
      %s29 = ssub.s32 %s23, 2
      %s36 = sadd.s32 1, %s31
      %p37 = scmp.ge.s32.totalorder %s36, 2
      %s38 = scalar_select %p37, 0, %s36
      %s39 = sadd.s32 1, %s30
      %s40 = scalar_select %p37, %s39, %s30
      %p41 = scmp.ge.s32.totalorder %s40, 2
      %s42 = scalar_select %p41, 0, %s40
      %s43 = ssub.s32 %s30, %s42
      %s44 = ssub.s32 %s31, %s38
      %s45 = sor.u32 %s43, %s44
      %p46 = scmp.eq.s32.totalorder %s45, 0
      %s48 = sadd.s32 %s47, 1
      %s49 = scalar_select %p46, %s47, %s48
      %p52 = pneg %p46
      %p53 = scmp.eq.s32.totalorder %s23, 3
      %p54 = por %p52, %p53
      %p55 = scmp.ne.s32.totalorder %s47, %s50
      %p56 = scmp.eq.s32.totalorder %s23, 0
      %p57 = por %p55, %p56
      %p58 = scmp.ne.s32.totalorder %s47, %s50
      %p59 = scmp.eq.s32.totalorder %s28, 3
      %p60 = por %p58, %p59
      %p61 = scmp.ne.s32.totalorder %s50, %s51
      %p62 = scmp.eq.s32.totalorder %s28, 0
      %p63 = por %p61, %p62
      %p64 = scmp.ne.s32.totalorder %s50, %s51
      %p65 = scmp.eq.s32.totalorder %s29, 3
      %p66 = por %p64, %p65
      %p68 = scmp.ne.s32.totalorder %s51, %s67
      %p69 = scmp.eq.s32.totalorder %s29, 0
      %p70 = por %p68, %p69
      %s71 = ssub.s32 %s31, %s38
      %p72 = scmp.eq.s32.totalorder %s71, 0
      %s74 = sadd.s32 %s73, 1
      %s75 = scalar_select %p72, %s73, %s74
      %p78 = pneg %p72
      %p79 = scmp.eq.s32.totalorder %s23, 3
      %p80 = por %p78, %p79
      %p81 = scmp.ne.s32.totalorder %s73, %s76
      %p82 = scmp.eq.s32.totalorder %s23, 0
      %p83 = por %p81, %p82
      %p84 = scmp.ne.s32.totalorder %s73, %s76
      %p85 = scmp.eq.s32.totalorder %s28, 3
      %p86 = por %p84, %p85
      %p87 = scmp.ne.s32.totalorder %s76, %s77
      %p88 = scmp.eq.s32.totalorder %s28, 0
      %p89 = por %p87, %p88
      %p90 = scmp.ne.s32.totalorder %s76, %s77
      %p91 = scmp.eq.s32.totalorder %s29, 3
      %p92 = por %p90, %p91
      %p94 = scmp.ne.s32.totalorder %s77, %s93
      %p95 = scmp.eq.s32.totalorder %s29, 0
      %p96 = por %p94, %p95
      %s98 = sadd.s32 %s97, 1
      %p101 = scmp.eq.s32.totalorder %s23, 3
      %p102 = scmp.ne.s32.totalorder %s97, %s99
      %p103 = scmp.eq.s32.totalorder %s23, 0
      %p104 = por %p102, %p103
      %p105 = scmp.ne.s32.totalorder %s97, %s99
      %p106 = scmp.eq.s32.totalorder %s28, 3
      %p107 = por %p105, %p106
      %p108 = scmp.ne.s32.totalorder %s99, %s100
      %p109 = scmp.eq.s32.totalorder %s28, 0
      %p110 = por %p108, %p109
      %p111 = scmp.ne.s32.totalorder %s99, %s100
      %p112 = scmp.eq.s32.totalorder %s29, 3
      %p113 = por %p111, %p112
      %p115 = scmp.ne.s32.totalorder %s100, %s114
      %p116 = scmp.eq.s32.totalorder %s29, 0
      %p117 = por %p115, %p116
      %s119 = sadd.s32 %s118, 1
      %p122 = scmp.eq.s32.totalorder %s23, 3
      %p123 = scmp.ne.s32.totalorder %s118, %s120
      %p124 = scmp.eq.s32.totalorder %s23, 0
      %p125 = por %p123, %p124
      %p126 = scmp.ne.s32.totalorder %s118, %s120
      %p127 = scmp.eq.s32.totalorder %s28, 3
      %p128 = por %p126, %p127
      %p129 = scmp.ne.s32.totalorder %s120, %s121
      %p130 = scmp.eq.s32.totalorder %s28, 0
      %p131 = por %p129, %p130
      %p132 = scmp.ne.s32.totalorder %s120, %s121
      %p133 = scmp.eq.s32.totalorder %s29, 3
      %p134 = por %p132, %p133
      %p136 = scmp.ne.s32.totalorder %s121, %s135
      %p137 = scmp.eq.s32.totalorder %s29, 0
      %p138 = por %p136, %p137
      %s140 = sadd.s32 %s139, 1
      %p143 = scmp.eq.s32.totalorder %s23, 3
      %p144 = scmp.ne.s32.totalorder %s139, %s141
      %p145 = scmp.eq.s32.totalorder %s23, 0
      %p146 = por %p144, %p145
      %p147 = scmp.ne.s32.totalorder %s139, %s141
      %p148 = scmp.eq.s32.totalorder %s28, 3
      %p149 = por %p147, %p148
      %p150 = scmp.ne.s32.totalorder %s141, %s142
      %p151 = scmp.eq.s32.totalorder %s28, 0
      %p152 = por %p150, %p151
      %p153 = scmp.ne.s32.totalorder %s141, %s142
      %p154 = scmp.eq.s32.totalorder %s29, 3
      %p155 = por %p153, %p154
      %p157 = scmp.ne.s32.totalorder %s142, %s156
      %p158 = scmp.eq.s32.totalorder %s29, 0
      %p159 = por %p157, %p158
      %s161 = sadd.s32 %s160, 1
      %p164 = scmp.eq.s32.totalorder %s23, 3
      %p165 = scmp.ne.s32.totalorder %s160, %s162
      %p166 = scmp.eq.s32.totalorder %s23, 0
      %p167 = por %p165, %p166
      %p168 = scmp.ne.s32.totalorder %s160, %s162
      %p169 = scmp.eq.s32.totalorder %s28, 3
      %p170 = por %p168, %p169
      %p171 = scmp.ne.s32.totalorder %s162, %s163
      %p172 = scmp.eq.s32.totalorder %s28, 0
      %p173 = por %p171, %p172
      %p174 = scmp.ne.s32.totalorder %s162, %s163
      %p175 = scmp.eq.s32.totalorder %s29, 3
      %p176 = por %p174, %p175
      %p178 = scmp.ne.s32.totalorder %s163, %s177
      %p179 = scmp.eq.s32.totalorder %s29, 0
      %p180 = por %p178, %p179
      %s182 = sadd.s32 %s181, 1
      %p185 = scmp.eq.s32.totalorder %s23, 3
      %p186 = scmp.ne.s32.totalorder %s181, %s183
      %p187 = scmp.eq.s32.totalorder %s23, 0
      %p188 = por %p186, %p187
      %p189 = scmp.ne.s32.totalorder %s181, %s183
      %p190 = scmp.eq.s32.totalorder %s28, 3
      %p191 = por %p189, %p190
      %p192 = scmp.ne.s32.totalorder %s183, %s184
      %p193 = scmp.eq.s32.totalorder %s28, 0
      %p194 = por %p192, %p193
      %p195 = scmp.ne.s32.totalorder %s183, %s184
      %p196 = scmp.eq.s32.totalorder %s29, 3
      %p197 = por %p195, %p196
      %p199 = scmp.ne.s32.totalorder %s184, %s198
      %p200 = scmp.eq.s32.totalorder %s29, 0
      %p201 = por %p199, %p200
      %s202 = ssub.s32 %s30, %s42
      %p203 = scmp.eq.s32.totalorder %s202, 0
      %s205 = sadd.s32 %s204, 1
      %s206 = scalar_select %p203, %s204, %s205
      %p209 = pneg %p203
      %p210 = scmp.eq.s32.totalorder %s23, 3
      %p211 = por %p209, %p210
      %p212 = scmp.ne.s32.totalorder %s204, %s207
      %p213 = scmp.eq.s32.totalorder %s23, 0
      %p214 = por %p212, %p213
      %p215 = scmp.ne.s32.totalorder %s204, %s207
      %p216 = scmp.eq.s32.totalorder %s28, 3
      %p217 = por %p215, %p216
      %p218 = scmp.ne.s32.totalorder %s207, %s208
      %p219 = scmp.eq.s32.totalorder %s28, 0
      %p220 = por %p218, %p219
      %p221 = scmp.ne.s32.totalorder %s207, %s208
      %p222 = scmp.eq.s32.totalorder %s29, 3
      %p223 = por %p221, %p222
      %p225 = scmp.ne.s32.totalorder %s208, %s224
      %p226 = scmp.eq.s32.totalorder %s29, 0
      %p227 = por %p225, %p226
      %p228 = scmp.le.s32.totalorder 1, %s23
      %p229 = scmp.lt.s32.totalorder %s23, 5
      %p230 = pnand %p228, %p229
      %p231 = pneg %p230
      // Predicated region
      $region9: #{tpu_custom_call.1} parent=5 // pred_check
        _
      $region10: #{tpu_custom_call.1} parent=5 // pred_check_branch
        %233 = sbr.rel (%p230) target = $region12
      $region11: #{tpu_custom_call.1} parent=5 // pred_region
        %s234 = ssub.s32 %s23, 1
        // Predicated region
        $region13: #{tpu_custom_call.1} parent=11 // pred_check
          %p235 = pneg %p110
        $region14: #{tpu_custom_call.1} parent=11 // pred_check_branch
          %237 = sbr.rel (%p235) target = $region16
        $region15: #{tpu_custom_call.1} parent=11 // pred_region
          _
        $region16: #{tpu_custom_call.1} parent=11 // pred_fallthru
          _
        // Predicated region
        $region17: #{tpu_custom_call.1} parent=11 // pred_check
          %p238 = pneg %p131
        $region18: #{tpu_custom_call.1} parent=11 // pred_check_branch
          %240 = sbr.rel (%p238) target = $region20
        $region19: #{tpu_custom_call.1} parent=11 // pred_region
          %s242 = ssub.s32 4096, 4096
          %243 = vsyncadd [#allocation7], %s242
          %s244 = sshll.u32 [#allocation8], 4
          %s245 = int_to_ptr.vmem [resolvable:$true] %s244
          %250 = dma.hbm_to_vmem [thread:$0]  %s3, 4096, %s245, [#allocation7], 128, 128, 8
        $region20: #{tpu_custom_call.1} parent=11 // pred_fallthru
          _
        // Predicated region
        $region21: #{tpu_custom_call.1} parent=11 // pred_check
          %p251 = pneg %p152
        $region22: #{tpu_custom_call.1} parent=11 // pred_check_branch
          %253 = sbr.rel (%p251) target = $region24
        $region23: #{tpu_custom_call.1} parent=11 // pred_region
          _
        $region24: #{tpu_custom_call.1} parent=11 // pred_fallthru
          _
        // Predicated region
        $region25: #{tpu_custom_call.1} parent=11 // pred_check
          %p254 = pneg %p173
        $region26: #{tpu_custom_call.1} parent=11 // pred_check_branch
          %256 = sbr.rel (%p254) target = $region28
        $region27: #{tpu_custom_call.1} parent=11 // pred_region
          %s258 = ssub.s32 2048, 2048
          %259 = vsyncadd [#allocation10], %s258
          %s260 = sshll.u32 [#allocation9], 4
          %s261 = int_to_ptr.vmem [resolvable:$true] %s260
          %266 = dma.hbm_to_vmem [thread:$0]  %s5, 2048, %s261, [#allocation10], 64, 64, 4
        $region28: #{tpu_custom_call.1} parent=11 // pred_fallthru
          _
        // Predicated region
        $region29: #{tpu_custom_call.1} parent=11 // pred_check
          %p267 = pneg %p194
        $region30: #{tpu_custom_call.1} parent=11 // pred_check_branch
          %269 = sbr.rel (%p267) target = $region32
        $region31: #{tpu_custom_call.1} parent=11 // pred_region
          _
        $region32: #{tpu_custom_call.1} parent=11 // pred_fallthru
          _
      $region12: #{tpu_custom_call.1} parent=5 // pred_fallthru
        _
      %p270 = scmp.lt.s32.totalorder %s23, 4
      // Predicated region
      $region33: #{tpu_custom_call.1} parent=5 // pred_check
        %p271 = pneg %p270
      $region34: #{tpu_custom_call.1} parent=5 // pred_check_branch
        %273 = sbr.rel (%p271) target = $region36
      $region35: #{tpu_custom_call.1} parent=5 // pred_region
        // Predicated region
        $region37: #{tpu_custom_call.1} parent=35 // pred_check
          %p274 = pneg %p57
        $region38: #{tpu_custom_call.1} parent=35 // pred_check_branch
          %276 = sbr.rel (%p274) target = $region40
        $region39: #{tpu_custom_call.1} parent=35 // pred_region
          %s277 = sand.u32 %s47, 1
          %s278 = scalar_lea.sflag [#allocation4], %s277
          %s279 = sand.u32 %s47, 1
          %s280 = smul.addr %s279, 64
          %s281 = scalar_lea.vmem [#allocation3], %s280
          %s282 = smul.u32 16, %s30
          %s284 = ssub.s32 1024, 1024
          %285 = vsyncadd %s278, %s284
          %s286 = smul.addr %s282, 2
          %s287 = sadd.s32 %s31, %s286
          %s288 = smul.addr %s287, 64
          %s289 = scalar_lea.hbm %s0, %s288
          %s290 = sshll.u32 %s281, 4
          %s291 = int_to_ptr.vmem [resolvable:$true] %s290
          %296 = dma.hbm_to_vmem [thread:$0]  %s289, 1024, %s291, %s278, 128, 64, 4
        $region40: #{tpu_custom_call.1} parent=35 // pred_fallthru
          _
        // Predicated region
        $region41: #{tpu_custom_call.1} parent=35 // pred_check
          %p297 = pneg %p83
        $region42: #{tpu_custom_call.1} parent=35 // pred_check_branch
          %299 = sbr.rel (%p297) target = $region44
        $region43: #{tpu_custom_call.1} parent=35 // pred_region
          %s300 = sand.u32 %s23, 1
          %s301 = scalar_lea.sflag [#allocation7], %s300
          %s302 = sand.u32 %s73, 1
          %s303 = smul.addr %s302, 128
          %s304 = scalar_lea.vmem [#allocation6], %s303
          %s305 = smul.u32 16, %s31
          %s307 = ssub.s32 2048, 2048
          %308 = vsyncadd %s301, %s307
          %s309 = smul.addr %s305, 2
          %s310 = smul.addr %s309, 64
          %s311 = scalar_lea.hbm %s1, %s310
          %s312 = sshll.u32 %s304, 4
          %s313 = int_to_ptr.vmem [resolvable:$true] %s312
          %318 = dma.hbm_to_vmem [thread:$0]  %s311, 2048, %s313, %s301, 128, 128, 8
        $region44: #{tpu_custom_call.1} parent=35 // pred_fallthru
          _
      $region36: #{tpu_custom_call.1} parent=5 // pred_fallthru
        _
      %p319 = scmp.le.s32.totalorder 1, %s23
      %p320 = scmp.lt.s32.totalorder %s23, 5
      %p321 = pnand %p319, %p320
      %p322 = pneg %p321
      // Predicated region
      $region45: #{tpu_custom_call.1} parent=5 // pred_check
        _
      $region46: #{tpu_custom_call.1} parent=5 // pred_check_branch
        %324 = sbr.rel (%p321) target = $region48
      $region47: #{tpu_custom_call.1} parent=5 // pred_region
        %s325 = ssub.s32 %s23, 1
        %s326 = sand.u32 %s50, 1
        %s327 = scalar_lea.sflag [#allocation4], %s326
        %s328 = sand.u32 %s50, 1
        %s329 = smul.addr %s328, 64
        %s330 = scalar_lea.vmem [#allocation3], %s329
        // Predicated region
        $region49: #{tpu_custom_call.1} parent=47 // pred_check
          %p331 = pneg %p63
        $region50: #{tpu_custom_call.1} parent=47 // pred_check_branch
          %333 = sbr.rel (%p331) target = $region52
        $region51: #{tpu_custom_call.1} parent=47 // pred_region
          %334 = dma.done %s327, 1024
        $region52: #{tpu_custom_call.1} parent=47 // pred_fallthru
          _
        %s335 = sand.u32 %s28, 1
        %s336 = scalar_lea.sflag [#allocation7], %s335
        %s337 = sand.u32 %s76, 1
        %s338 = smul.addr %s337, 128
        %s339 = scalar_lea.vmem [#allocation6], %s338
        // Predicated region
        $region53: #{tpu_custom_call.1} parent=47 // pred_check
          %p340 = pneg %p89
        $region54: #{tpu_custom_call.1} parent=47 // pred_check_branch
          %342 = sbr.rel (%p340) target = $region56
        $region55: #{tpu_custom_call.1} parent=47 // pred_region
          %343 = dma.done %s336, 2048
        $region56: #{tpu_custom_call.1} parent=47 // pred_fallthru
          _
        // Predicated region
        $region57: #{tpu_custom_call.1} parent=47 // pred_check
          %p344 = pneg %p131
        $region58: #{tpu_custom_call.1} parent=47 // pred_check_branch
          %346 = sbr.rel (%p344) target = $region60
        $region59: #{tpu_custom_call.1} parent=47 // pred_region
          %347 = dma.done [#allocation7], 4096
        $region60: #{tpu_custom_call.1} parent=47 // pred_fallthru
          _
        // Predicated region
        $region61: #{tpu_custom_call.1} parent=47 // pred_check
          %p348 = pneg %p173
        $region62: #{tpu_custom_call.1} parent=47 // pred_check_branch
          %350 = sbr.rel (%p348) target = $region64
        $region63: #{tpu_custom_call.1} parent=47 // pred_region
          %351 = dma.done [#allocation10], 2048
        $region64: #{tpu_custom_call.1} parent=47 // pred_fallthru
          _
        %s352 = sand.u32 %s50, 1
        %s353 = scalar_lea.sflag [#allocation4], %s352
        %s354 = sand.u32 %s50, 1
        %s355 = smul.addr %s354, 64
        %s356 = scalar_lea.vmem [#allocation3], %s355
        %p357 = pneg %p63
        %p358 = pneg %p60
        %s359 = sand.u32 %s28, 1
        %s360 = scalar_lea.sflag [#allocation7], %s359
        %s361 = sand.u32 %s76, 1
        %s362 = smul.addr %s361, 128
        %s363 = scalar_lea.vmem [#allocation6], %s362
        %p364 = pneg %p89
        %p365 = pneg %p86
        %p366 = pneg %p110
        %p367 = pneg %p107
        %p368 = pneg %p131
        %p369 = pneg %p128
        %p370 = pneg %p152
        %p371 = pneg %p149
        %p372 = pneg %p173
        %p373 = pneg %p170
        %p374 = pneg %p194
        %p375 = pneg %p191
        %p376 = pneg %p220
        %p377 = pneg %p217
        %s378 = sand.u32 %s207, 1
        %s379 = scalar_lea.sflag [#allocation5], %s378
        %s380 = sand.u32 %s207, 1
        %s381 = smul.addr %s380, 128
        %s382 = scalar_lea.vmem [#allocation11], %s381
        %s383 = smul.u32 16, %s32
        %s384 = smul.u32 16, %s33
        %s385 = smul.u32 16, %s32
        %p387 = scmp.eq.s32.totalorder %s33, 0
        // Predicated region
        $region65: #{tpu_custom_call.1} parent=47 // pred_check
          %p388 = pneg %p387
        $region66: #{tpu_custom_call.1} parent=47 // pred_check_branch
          %390 = sbr.rel (%p388) target = $region68
        $region67: #{tpu_custom_call.1} parent=47 // pred_region
          %391 = vst [vmem:[#allocation2] sm:$0xff] 0.0
          %392 = vst [vmem:[#allocation2 + $0x8] sm:$0xff] 0.0
          %393 = vst [vmem:[#allocation2 + $0x10] sm:$0xff] 0.0
          %394 = vst [vmem:[#allocation2 + $0x18] sm:$0xff] 0.0
          %395 = vst [vmem:[#allocation2 + $0x20] sm:$0xff] 0.0
          %396 = vst [vmem:[#allocation2 + $0x28] sm:$0xff] 0.0
          %397 = vst [vmem:[#allocation2 + $0x30] sm:$0xff] 0.0
          %398 = vst [vmem:[#allocation2 + $0x38] sm:$0xff] 0.0
          %399 = vst [vmem:[#allocation2 + $0x40] sm:$0xff] 0.0
          %400 = vst [vmem:[#allocation2 + $0x48] sm:$0xff] 0.0
          %401 = vst [vmem:[#allocation2 + $0x50] sm:$0xff] 0.0
          %402 = vst [vmem:[#allocation2 + $0x58] sm:$0xff] 0.0
          %403 = vst [vmem:[#allocation2 + $0x60] sm:$0xff] 0.0
          %404 = vst [vmem:[#allocation2 + $0x68] sm:$0xff] 0.0
          %405 = vst [vmem:[#allocation2 + $0x70] sm:$0xff] 0.0
          %406 = vst [vmem:[#allocation2 + $0x78] sm:$0xff] 0.0
          %407 = vst [vmem:[#allocation2 + $0x80] sm:$0xff] 0.0
          %408 = vst [vmem:[#allocation2 + $0x88] sm:$0xff] 0.0
          %409 = vst [vmem:[#allocation2 + $0x90] sm:$0xff] 0.0
          %410 = vst [vmem:[#allocation2 + $0x98] sm:$0xff] 0.0
          %411 = vst [vmem:[#allocation2 + $0xa0] sm:$0xff] 0.0
          %412 = vst [vmem:[#allocation2 + $0xa8] sm:$0xff] 0.0
          %413 = vst [vmem:[#allocation2 + $0xb0] sm:$0xff] 0.0
          %414 = vst [vmem:[#allocation2 + $0xb8] sm:$0xff] 0.0
          %415 = vst [vmem:[#allocation2 + $0xc0] sm:$0xff] 0.0
          %416 = vst [vmem:[#allocation2 + $0xc8] sm:$0xff] 0.0
          %417 = vst [vmem:[#allocation2 + $0xd0] sm:$0xff] 0.0
          %418 = vst [vmem:[#allocation2 + $0xd8] sm:$0xff] 0.0
          %419 = vst [vmem:[#allocation2 + $0xe0] sm:$0xff] 0.0
          %420 = vst [vmem:[#allocation2 + $0xe8] sm:$0xff] 0.0
          %421 = vst [vmem:[#allocation2 + $0xf0] sm:$0xff] 0.0
          %422 = vst [vmem:[#allocation2 + $0xf8] sm:$0xff] 0.0
        $region68: #{tpu_custom_call.1} parent=47 // pred_fallthru
          _
        %v423 = vld [vmem:[#allocation2] sm:$0xff]
        %v424 = vld [vmem:[#allocation2 + $0x8] sm:$0xff]
        %v425 = vld [vmem:[#allocation2 + $0x10] sm:$0xff]
        %v426 = vld [vmem:[#allocation2 + $0x18] sm:$0xff]
        %v427 = vld [vmem:[#allocation2 + $0x20] sm:$0xff]
        %v428 = vld [vmem:[#allocation2 + $0x28] sm:$0xff]
        %v429 = vld [vmem:[#allocation2 + $0x30] sm:$0xff]
        %v430 = vld [vmem:[#allocation2 + $0x38] sm:$0xff]
        %v431 = vld [vmem:[#allocation2 + $0x40] sm:$0xff]
        %v432 = vld [vmem:[#allocation2 + $0x48] sm:$0xff]
        %v433 = vld [vmem:[#allocation2 + $0x50] sm:$0xff]
        %v434 = vld [vmem:[#allocation2 + $0x58] sm:$0xff]
        %v435 = vld [vmem:[#allocation2 + $0x60] sm:$0xff]
        %v436 = vld [vmem:[#allocation2 + $0x68] sm:$0xff]
        %v437 = vld [vmem:[#allocation2 + $0x70] sm:$0xff]
        %v438 = vld [vmem:[#allocation2 + $0x78] sm:$0xff]
        %v439 = vld [vmem:[#allocation2 + $0x80] sm:$0xff]
        %v440 = vld [vmem:[#allocation2 + $0x88] sm:$0xff]
        %v441 = vld [vmem:[#allocation2 + $0x90] sm:$0xff]
        %v442 = vld [vmem:[#allocation2 + $0x98] sm:$0xff]
        %v443 = vld [vmem:[#allocation2 + $0xa0] sm:$0xff]
        %v444 = vld [vmem:[#allocation2 + $0xa8] sm:$0xff]
        %v445 = vld [vmem:[#allocation2 + $0xb0] sm:$0xff]
        %v446 = vld [vmem:[#allocation2 + $0xb8] sm:$0xff]
        %v447 = vld [vmem:[#allocation2 + $0xc0] sm:$0xff]
        %v448 = vld [vmem:[#allocation2 + $0xc8] sm:$0xff]
        %v449 = vld [vmem:[#allocation2 + $0xd0] sm:$0xff]
        %v450 = vld [vmem:[#allocation2 + $0xd8] sm:$0xff]
        %v451 = vld [vmem:[#allocation2 + $0xe0] sm:$0xff]
        %v452 = vld [vmem:[#allocation2 + $0xe8] sm:$0xff]
        %v453 = vld [vmem:[#allocation2 + $0xf0] sm:$0xff]
        %v454 = vld [vmem:[#allocation2 + $0xf8] sm:$0xff]
        %v455 = vld [vmem:[%s330] sm:$0xf]
        %v456 = vld [vmem:[%s330 + $0x4] sm:$0xf]
        %v457 = vld [vmem:[%s330 + $0x8] sm:$0xf]
        %v458 = vld [vmem:[%s330 + $0xc] sm:$0xf]
        %v459 = vld [vmem:[%s330 + $0x10] sm:$0xf]
        %v460 = vld [vmem:[%s330 + $0x14] sm:$0xf]
        %v461 = vld [vmem:[%s330 + $0x18] sm:$0xf]
        %v462 = vld [vmem:[%s330 + $0x1c] sm:$0xf]
        %v463 = vld [vmem:[%s330 + $0x20] sm:$0xf]
        %v464 = vld [vmem:[%s330 + $0x24] sm:$0xf]
        %v465 = vld [vmem:[%s330 + $0x28] sm:$0xf]
        %v466 = vld [vmem:[%s330 + $0x2c] sm:$0xf]
        %v467 = vld [vmem:[%s330 + $0x30] sm:$0xf]
        %v468 = vld [vmem:[%s330 + $0x34] sm:$0xf]
        %v469 = vld [vmem:[%s330 + $0x38] sm:$0xf]
        %v470 = vld [vmem:[%s330 + $0x3c] sm:$0xf]
        %v471 = vld [vmem:[%s339] sm:$0xff]
        %v472 = vld [vmem:[%s339 + $0x8] sm:$0xff]
        %v473 = vld [vmem:[%s339 + $0x10] sm:$0xff]
        %v474 = vld [vmem:[%s339 + $0x18] sm:$0xff]
        %v475 = vld [vmem:[%s339 + $0x20] sm:$0xff]
        %v476 = vld [vmem:[%s339 + $0x28] sm:$0xff]
        %v477 = vld [vmem:[%s339 + $0x30] sm:$0xff]
        %v478 = vld [vmem:[%s339 + $0x38] sm:$0xff]
        %v479 = vld [vmem:[%s339 + $0x40] sm:$0xff]
        %v480 = vld [vmem:[%s339 + $0x48] sm:$0xff]
        %v481 = vld [vmem:[%s339 + $0x50] sm:$0xff]
        %v482 = vld [vmem:[%s339 + $0x58] sm:$0xff]
        %v483 = vld [vmem:[%s339 + $0x60] sm:$0xff]
        %v484 = vld [vmem:[%s339 + $0x68] sm:$0xff]
        %v485 = vld [vmem:[%s339 + $0x70] sm:$0xff]
        %v486 = vld [vmem:[%s339 + $0x78] sm:$0xff]
        %v503 = vunpack.c.l.b16 %v455
        %v504 = vunpack.c.l.b16 %v456
        %v505 = vunpack.c.l.b16 %v457
        %v506 = vunpack.c.l.b16 %v458
        %v507 = vunpack.c.l.b16 %v459
        %v508 = vunpack.c.l.b16 %v460
        %v509 = vunpack.c.l.b16 %v461
        %v510 = vunpack.c.l.b16 %v462
        %v511 = vunpack.c.l.b16 %v463
        %v512 = vunpack.c.l.b16 %v464
        %v513 = vunpack.c.l.b16 %v465
        %v514 = vunpack.c.l.b16 %v466
        %v515 = vunpack.c.l.b16 %v467
        %v516 = vunpack.c.l.b16 %v468
        %v517 = vunpack.c.l.b16 %v469
        %v518 = vunpack.c.l.b16 %v470
        %v519 = vpack.c.b16 %v504, %v503
        %v520 = vpack.c.b16 %v506, %v505
        %v521 = vpack.c.b16 %v508, %v507
        %v522 = vpack.c.b16 %v510, %v509
        %v523 = vpack.c.b16 %v512, %v511
        %v524 = vpack.c.b16 %v514, %v513
        %v525 = vpack.c.b16 %v516, %v515
        %v526 = vpack.c.b16 %v518, %v517
        %v551 = vunpack.c.l.b16 %v471
        %v552 = vunpack.c.h.b16 %v471
        %v553 = vunpack.c.l.b16 %v472
        %v554 = vunpack.c.h.b16 %v472
        %v555 = vunpack.c.l.b16 %v473
        %v556 = vunpack.c.h.b16 %v473
        %v557 = vunpack.c.l.b16 %v474
        %v558 = vunpack.c.h.b16 %v474
        %v559 = vunpack.c.l.b16 %v475
        %v560 = vunpack.c.h.b16 %v475
        %v561 = vunpack.c.l.b16 %v476
        %v562 = vunpack.c.h.b16 %v476
        %v563 = vunpack.c.l.b16 %v477
        %v564 = vunpack.c.h.b16 %v477
        %v565 = vunpack.c.l.b16 %v478
        %v566 = vunpack.c.h.b16 %v478
        %v567 = vunpack.c.l.b16 %v479
        %v568 = vunpack.c.h.b16 %v479
        %v569 = vunpack.c.l.b16 %v480
        %v570 = vunpack.c.h.b16 %v480
        %v571 = vunpack.c.l.b16 %v481
        %v572 = vunpack.c.h.b16 %v481
        %v573 = vunpack.c.l.b16 %v482
        %v574 = vunpack.c.h.b16 %v482
        %v575 = vunpack.c.l.b16 %v483
        %v576 = vunpack.c.h.b16 %v483
        %v577 = vunpack.c.l.b16 %v484
        %v578 = vunpack.c.h.b16 %v484
        %v579 = vunpack.c.l.b16 %v485
        %v580 = vunpack.c.h.b16 %v485
        %v581 = vunpack.c.l.b16 %v486
        %v582 = vunpack.c.h.b16 %v486
        %v583 = vpack.c.b16 %v553, %v551
        %v584 = vpack.c.b16 %v554, %v552
        %v585 = vpack.c.b16 %v557, %v555
        %v586 = vpack.c.b16 %v558, %v556
        %v587 = vpack.c.b16 %v561, %v559
        %v588 = vpack.c.b16 %v562, %v560
        %v589 = vpack.c.b16 %v565, %v563
        %v590 = vpack.c.b16 %v566, %v564
        %v591 = vpack.c.b16 %v569, %v567
        %v592 = vpack.c.b16 %v570, %v568
        %v593 = vpack.c.b16 %v573, %v571
        %v594 = vpack.c.b16 %v574, %v572
        %v595 = vpack.c.b16 %v577, %v575
        %v596 = vpack.c.b16 %v578, %v576
        %v597 = vpack.c.b16 %v581, %v579
        %v598 = vpack.c.b16 %v582, %v580
        %615 = vmatprep.subr.bf16.mxu0 %v584
        %616 = vmatpush1.bf16.msra.mxu0 %v583
        %617 = vmatprep.subr.bf16.mxu0 %v586
        %618 = vmatpush1.bf16.msra.mxu0 %v585
        %619 = vmatprep.subr.bf16.mxu0 %v588
        %620 = vmatpush1.bf16.msra.mxu0 %v587
        %621 = vmatprep.subr.bf16.mxu0 %v590
        %622 = vmatpush1.bf16.msra.mxu0 %v589
        %623 = vmatprep.subr.bf16.mxu0 %v592
        %624 = vmatpush1.bf16.msra.mxu0 %v591
        %625 = vmatprep.subr.bf16.mxu0 %v594
        %626 = vmatpush1.bf16.msra.mxu0 %v593
        %627 = vmatprep.subr.bf16.mxu0 %v596
        %628 = vmatpush1.bf16.msra.mxu0 %v595
        %629 = vmatprep.subr.bf16.mxu0 %v598
        %630 = vmatpush1.bf16.msra.mxu0 %v597
        %631 = vmatprep.subr.bf16.mxu0 0
        %632 = vmatpush1.bf16.msra.mxu0 0
        %633 = vmatprep.subr.bf16.mxu0 0
        %634 = vmatpush1.bf16.msra.mxu0 0
        %635 = vmatprep.subr.bf16.mxu0 0
        %636 = vmatpush1.bf16.msra.mxu0 0
        %637 = vmatprep.subr.bf16.mxu0 0
        %638 = vmatpush1.bf16.msra.mxu0 0
        %639 = vmatprep.subr.bf16.mxu0 0
        %640 = vmatpush1.bf16.msra.mxu0 0
        %641 = vmatprep.subr.bf16.mxu0 0
        %642 = vmatpush1.bf16.msra.mxu0 0
        %643 = vmatprep.subr.bf16.mxu0 0
        %644 = vmatpush1.bf16.msra.mxu0 0
        %645 = vmatprep.subr.bf16.mxu0 0
        %646 = vmatpush1.bf16.msra.mxu0 0
        %647 = vmatprep.mubr.bf16.mxu0 0
        %648 = vmatmul.mubr.bf16.gmra.mrb[0].mxu0 %v519
        %v649 = vpop.f32.mrb[0].mxu0
        %v650 = vadd.f32 0.0, %v649
        %v651 = vpop.f32.mrb[0].mxu0
        %v652 = vadd.f32 0.0, %v651
        %v653 = vpop.f32.mrb[0].mxu0
        %v654 = vadd.f32 0.0, %v653
        %v655 = vpop.f32.mrb[0].mxu0
        %v656 = vadd.f32 0.0, %v655
        %657 = vmatprep.mubr.bf16.mxu0 0
        %658 = vmatmul.mubr.bf16.gmra.mrb[0].mxu0 %v520
        %v659 = vpop.f32.mrb[0].mxu0
        %v660 = vadd.f32 0.0, %v659
        %v661 = vpop.f32.mrb[0].mxu0
        %v662 = vadd.f32 0.0, %v661
        %v663 = vpop.f32.mrb[0].mxu0
        %v664 = vadd.f32 0.0, %v663
        %v665 = vpop.f32.mrb[0].mxu0
        %v666 = vadd.f32 0.0, %v665
        %667 = vmatprep.mubr.bf16.mxu0 0
        %668 = vmatmul.mubr.bf16.gmra.mrb[0].mxu0 %v521
        %v669 = vpop.f32.mrb[0].mxu0
        %v670 = vadd.f32 0.0, %v669
        %v671 = vpop.f32.mrb[0].mxu0
        %v672 = vadd.f32 0.0, %v671
        %v673 = vpop.f32.mrb[0].mxu0
        %v674 = vadd.f32 0.0, %v673
        %v675 = vpop.f32.mrb[0].mxu0
        %v676 = vadd.f32 0.0, %v675
        %677 = vmatprep.mubr.bf16.mxu0 0
        %678 = vmatmul.mubr.bf16.gmra.mrb[0].mxu0 %v522
        %v679 = vpop.f32.mrb[0].mxu0
        %v680 = vadd.f32 0.0, %v679
        %v681 = vpop.f32.mrb[0].mxu0
        %v682 = vadd.f32 0.0, %v681
        %v683 = vpop.f32.mrb[0].mxu0
        %v684 = vadd.f32 0.0, %v683
        %v685 = vpop.f32.mrb[0].mxu0
        %v686 = vadd.f32 0.0, %v685
        %687 = vmatprep.mubr.bf16.mxu0 0
        %688 = vmatmul.mubr.bf16.gmra.mrb[0].mxu0 %v523
        %v689 = vpop.f32.mrb[0].mxu0
        %v690 = vadd.f32 0.0, %v689
        %v691 = vpop.f32.mrb[0].mxu0
        %v692 = vadd.f32 0.0, %v691
        %v693 = vpop.f32.mrb[0].mxu0
        %v694 = vadd.f32 0.0, %v693
        %v695 = vpop.f32.mrb[0].mxu0
        %v696 = vadd.f32 0.0, %v695
        %697 = vmatprep.mubr.bf16.mxu0 0
        %698 = vmatmul.mubr.bf16.gmra.mrb[0].mxu0 %v524
        %v699 = vpop.f32.mrb[0].mxu0
        %v700 = vadd.f32 0.0, %v699
        %v701 = vpop.f32.mrb[0].mxu0
        %v702 = vadd.f32 0.0, %v701
        %v703 = vpop.f32.mrb[0].mxu0
        %v704 = vadd.f32 0.0, %v703
        %v705 = vpop.f32.mrb[0].mxu0
        %v706 = vadd.f32 0.0, %v705
        %707 = vmatprep.mubr.bf16.mxu0 0
        %708 = vmatmul.mubr.bf16.gmra.mrb[0].mxu0 %v525
        %v709 = vpop.f32.mrb[0].mxu0
        %v710 = vadd.f32 0.0, %v709
        %v711 = vpop.f32.mrb[0].mxu0
        %v712 = vadd.f32 0.0, %v711
        %v713 = vpop.f32.mrb[0].mxu0
        %v714 = vadd.f32 0.0, %v713
        %v715 = vpop.f32.mrb[0].mxu0
        %v716 = vadd.f32 0.0, %v715
        %717 = vmatprep.mubr.bf16.mxu0 0
        %718 = vmatmul.mubr.bf16.gmra.mrb[0].mxu0 %v526
        %v719 = vpop.f32.mrb[0].mxu0
        %v720 = vadd.f32 0.0, %v719
        %v721 = vpop.f32.mrb[0].mxu0
        %v722 = vadd.f32 0.0, %v721
        %v723 = vpop.f32.mrb[0].mxu0
        %v724 = vadd.f32 0.0, %v723
        %v725 = vpop.f32.mrb[0].mxu0
        %v726 = vadd.f32 0.0, %v725
        %727 = vdwg.mxu0
        %v728 = vadd.f32 %v423, %v650
        %v729 = vadd.f32 %v424, %v652
        %v730 = vadd.f32 %v425, %v654
        %v731 = vadd.f32 %v426, %v656
        %v732 = vadd.f32 %v427, %v660
        %v733 = vadd.f32 %v428, %v662
        %v734 = vadd.f32 %v429, %v664
        %v735 = vadd.f32 %v430, %v666
        %v736 = vadd.f32 %v431, %v670
        %v737 = vadd.f32 %v432, %v672
        %v738 = vadd.f32 %v433, %v674
        %v739 = vadd.f32 %v434, %v676
        %v740 = vadd.f32 %v435, %v680
        %v741 = vadd.f32 %v436, %v682
        %v742 = vadd.f32 %v437, %v684
        %v743 = vadd.f32 %v438, %v686
        %v744 = vadd.f32 %v439, %v690
        %v745 = vadd.f32 %v440, %v692
        %v746 = vadd.f32 %v441, %v694
        %v747 = vadd.f32 %v442, %v696
        %v748 = vadd.f32 %v443, %v700
        %v749 = vadd.f32 %v444, %v702
        %v750 = vadd.f32 %v445, %v704
        %v751 = vadd.f32 %v446, %v706
        %v752 = vadd.f32 %v447, %v710
        %v753 = vadd.f32 %v448, %v712
        %v754 = vadd.f32 %v449, %v714
        %v755 = vadd.f32 %v450, %v716
        %v756 = vadd.f32 %v451, %v720
        %v757 = vadd.f32 %v452, %v722
        %v758 = vadd.f32 %v453, %v724
        %v759 = vadd.f32 %v454, %v726
        %760 = vst [vmem:[#allocation2] sm:$0xff] %v728
        %761 = vst [vmem:[#allocation2 + $0x8] sm:$0xff] %v729
        %762 = vst [vmem:[#allocation2 + $0x10] sm:$0xff] %v730
        %763 = vst [vmem:[#allocation2 + $0x18] sm:$0xff] %v731
        %764 = vst [vmem:[#allocation2 + $0x20] sm:$0xff] %v732
        %765 = vst [vmem:[#allocation2 + $0x28] sm:$0xff] %v733
        %766 = vst [vmem:[#allocation2 + $0x30] sm:$0xff] %v734
        %767 = vst [vmem:[#allocation2 + $0x38] sm:$0xff] %v735
        %768 = vst [vmem:[#allocation2 + $0x40] sm:$0xff] %v736
        %769 = vst [vmem:[#allocation2 + $0x48] sm:$0xff] %v737
        %770 = vst [vmem:[#allocation2 + $0x50] sm:$0xff] %v738
        %771 = vst [vmem:[#allocation2 + $0x58] sm:$0xff] %v739
        %772 = vst [vmem:[#allocation2 + $0x60] sm:$0xff] %v740
        %773 = vst [vmem:[#allocation2 + $0x68] sm:$0xff] %v741
        %774 = vst [vmem:[#allocation2 + $0x70] sm:$0xff] %v742
        %775 = vst [vmem:[#allocation2 + $0x78] sm:$0xff] %v743
        %776 = vst [vmem:[#allocation2 + $0x80] sm:$0xff] %v744
        %777 = vst [vmem:[#allocation2 + $0x88] sm:$0xff] %v745
        %778 = vst [vmem:[#allocation2 + $0x90] sm:$0xff] %v746
        %779 = vst [vmem:[#allocation2 + $0x98] sm:$0xff] %v747
        %780 = vst [vmem:[#allocation2 + $0xa0] sm:$0xff] %v748
        %781 = vst [vmem:[#allocation2 + $0xa8] sm:$0xff] %v749
        %782 = vst [vmem:[#allocation2 + $0xb0] sm:$0xff] %v750
        %783 = vst [vmem:[#allocation2 + $0xb8] sm:$0xff] %v751
        %784 = vst [vmem:[#allocation2 + $0xc0] sm:$0xff] %v752
        %785 = vst [vmem:[#allocation2 + $0xc8] sm:$0xff] %v753
        %786 = vst [vmem:[#allocation2 + $0xd0] sm:$0xff] %v754
        %787 = vst [vmem:[#allocation2 + $0xd8] sm:$0xff] %v755
        %788 = vst [vmem:[#allocation2 + $0xe0] sm:$0xff] %v756
        %789 = vst [vmem:[#allocation2 + $0xe8] sm:$0xff] %v757
        %790 = vst [vmem:[#allocation2 + $0xf0] sm:$0xff] %v758
        %791 = vst [vmem:[#allocation2 + $0xf8] sm:$0xff] %v759
        %p792 = scmp.eq.s32.totalorder %s33, 1
        // Predicated region
        $region69: #{tpu_custom_call.1} parent=47 // pred_check
          %p793 = pneg %p792
        $region70: #{tpu_custom_call.1} parent=47 // pred_check_branch
          %795 = sbr.rel (%p793) target = $region72
        $region71: #{tpu_custom_call.1} parent=47 // pred_region
          %v796 = vld [vmem:[#allocation2] sm:$0xff]
          %v797 = vld [vmem:[#allocation2 + $0x8] sm:$0xff]
          %v798 = vld [vmem:[#allocation2 + $0x10] sm:$0xff]
          %v799 = vld [vmem:[#allocation2 + $0x18] sm:$0xff]
          %v800 = vld [vmem:[#allocation2 + $0x20] sm:$0xff]
          %v801 = vld [vmem:[#allocation2 + $0x28] sm:$0xff]
          %v802 = vld [vmem:[#allocation2 + $0x30] sm:$0xff]
          %v803 = vld [vmem:[#allocation2 + $0x38] sm:$0xff]
          %v804 = vld [vmem:[#allocation2 + $0x40] sm:$0xff]
          %v805 = vld [vmem:[#allocation2 + $0x48] sm:$0xff]
          %v806 = vld [vmem:[#allocation2 + $0x50] sm:$0xff]
          %v807 = vld [vmem:[#allocation2 + $0x58] sm:$0xff]
          %v808 = vld [vmem:[#allocation2 + $0x60] sm:$0xff]
          %v809 = vld [vmem:[#allocation2 + $0x68] sm:$0xff]
          %v810 = vld [vmem:[#allocation2 + $0x70] sm:$0xff]
          %v811 = vld [vmem:[#allocation2 + $0x78] sm:$0xff]
          %v812 = vld [vmem:[#allocation2 + $0x80] sm:$0xff]
          %v813 = vld [vmem:[#allocation2 + $0x88] sm:$0xff]
          %v814 = vld [vmem:[#allocation2 + $0x90] sm:$0xff]
          %v815 = vld [vmem:[#allocation2 + $0x98] sm:$0xff]
          %v816 = vld [vmem:[#allocation2 + $0xa0] sm:$0xff]
          %v817 = vld [vmem:[#allocation2 + $0xa8] sm:$0xff]
          %v818 = vld [vmem:[#allocation2 + $0xb0] sm:$0xff]
          %v819 = vld [vmem:[#allocation2 + $0xb8] sm:$0xff]
          %v820 = vld [vmem:[#allocation2 + $0xc0] sm:$0xff]
          %v821 = vld [vmem:[#allocation2 + $0xc8] sm:$0xff]
          %v822 = vld [vmem:[#allocation2 + $0xd0] sm:$0xff]
          %v823 = vld [vmem:[#allocation2 + $0xd8] sm:$0xff]
          %v824 = vld [vmem:[#allocation2 + $0xe0] sm:$0xff]
          %v825 = vld [vmem:[#allocation2 + $0xe8] sm:$0xff]
          %v826 = vld [vmem:[#allocation2 + $0xf0] sm:$0xff]
          %v827 = vld [vmem:[#allocation2 + $0xf8] sm:$0xff]
          %v828 = vld [vmem:[%s2] sm:$0x3]
          %v830 = vlaneseq
          %v831 = vshrl.u32 %v830, 7
          %v832 = vsub.s32 0, %v831
          %v833 = vrot.slane %v828, %v832
          %v834 = vlaneseq
          %v835 = vshrl.u32 %v834, 7
          %v836 = vsub.s32 1, %v835
          %v837 = vrot.slane %v828, %v836
          %v840 = vadd.f32 %v796, %v833
          %v841 = vadd.f32 %v797, %v837
          %v842 = vadd.f32 %v798, %v833
          %v843 = vadd.f32 %v799, %v837
          %v844 = vadd.f32 %v800, %v833
          %v845 = vadd.f32 %v801, %v837
          %v846 = vadd.f32 %v802, %v833
          %v847 = vadd.f32 %v803, %v837
          %v848 = vadd.f32 %v804, %v833
          %v849 = vadd.f32 %v805, %v837
          %v850 = vadd.f32 %v806, %v833
          %v851 = vadd.f32 %v807, %v837
          %v852 = vadd.f32 %v808, %v833
          %v853 = vadd.f32 %v809, %v837
          %v854 = vadd.f32 %v810, %v833
          %v855 = vadd.f32 %v811, %v837
          %v856 = vadd.f32 %v812, %v833
          %v857 = vadd.f32 %v813, %v837
          %v858 = vadd.f32 %v814, %v833
          %v859 = vadd.f32 %v815, %v837
          %v860 = vadd.f32 %v816, %v833
          %v861 = vadd.f32 %v817, %v837
          %v862 = vadd.f32 %v818, %v833
          %v863 = vadd.f32 %v819, %v837
          %v864 = vadd.f32 %v820, %v833
          %v865 = vadd.f32 %v821, %v837
          %v866 = vadd.f32 %v822, %v833
          %v867 = vadd.f32 %v823, %v837
          %v868 = vadd.f32 %v824, %v833
          %v869 = vadd.f32 %v825, %v837
          %v870 = vadd.f32 %v826, %v833
          %v871 = vadd.f32 %v827, %v837
          %v872 = vmax.f32 %v840, 0.0
          %v873 = vmax.f32 %v841, 0.0
          %v874 = vmax.f32 %v842, 0.0
          %v875 = vmax.f32 %v843, 0.0
          %v876 = vmax.f32 %v844, 0.0
          %v877 = vmax.f32 %v845, 0.0
          %v878 = vmax.f32 %v846, 0.0
          %v879 = vmax.f32 %v847, 0.0
          %v880 = vmax.f32 %v848, 0.0
          %v881 = vmax.f32 %v849, 0.0
          %v882 = vmax.f32 %v850, 0.0
          %v883 = vmax.f32 %v851, 0.0
          %v884 = vmax.f32 %v852, 0.0
          %v885 = vmax.f32 %v853, 0.0
          %v886 = vmax.f32 %v854, 0.0
          %v887 = vmax.f32 %v855, 0.0
          %v888 = vmax.f32 %v856, 0.0
          %v889 = vmax.f32 %v857, 0.0
          %v890 = vmax.f32 %v858, 0.0
          %v891 = vmax.f32 %v859, 0.0
          %v892 = vmax.f32 %v860, 0.0
          %v893 = vmax.f32 %v861, 0.0
          %v894 = vmax.f32 %v862, 0.0
          %v895 = vmax.f32 %v863, 0.0
          %v896 = vmax.f32 %v864, 0.0
          %v897 = vmax.f32 %v865, 0.0
          %v898 = vmax.f32 %v866, 0.0
          %v899 = vmax.f32 %v867, 0.0
          %v900 = vmax.f32 %v868, 0.0
          %v901 = vmax.f32 %v869, 0.0
          %v902 = vmax.f32 %v870, 0.0
          %v903 = vmax.f32 %v871, 0.0
          %v904 = vpack.c.bf16 %v874, %v872
          %v905 = vpack.c.bf16 %v875, %v873
          %v906 = vpack.c.bf16 %v878, %v876
          %v907 = vpack.c.bf16 %v879, %v877
          %v908 = vpack.c.bf16 %v882, %v880
          %v909 = vpack.c.bf16 %v883, %v881
          %v910 = vpack.c.bf16 %v886, %v884
          %v911 = vpack.c.bf16 %v887, %v885
          %v912 = vpack.c.bf16 %v890, %v888
          %v913 = vpack.c.bf16 %v891, %v889
          %v914 = vpack.c.bf16 %v894, %v892
          %v915 = vpack.c.bf16 %v895, %v893
          %v916 = vpack.c.bf16 %v898, %v896
          %v917 = vpack.c.bf16 %v899, %v897
          %v918 = vpack.c.bf16 %v902, %v900
          %v919 = vpack.c.bf16 %v903, %v901
          %v920 = vld [vmem:[#allocation8] sm:$0xff]
          %v921 = vld [vmem:[#allocation8 + $0x8] sm:$0xff]
          %v922 = vld [vmem:[#allocation8 + $0x10] sm:$0xff]
          %v923 = vld [vmem:[#allocation8 + $0x18] sm:$0xff]
          %v924 = vld [vmem:[#allocation8 + $0x20] sm:$0xff]
          %v925 = vld [vmem:[#allocation8 + $0x28] sm:$0xff]
          %v926 = vld [vmem:[#allocation8 + $0x30] sm:$0xff]
          %v927 = vld [vmem:[#allocation8 + $0x38] sm:$0xff]
          %v928 = vld [vmem:[#allocation8 + $0x40] sm:$0xff]
          %v929 = vld [vmem:[#allocation8 + $0x48] sm:$0xff]
          %v930 = vld [vmem:[#allocation8 + $0x50] sm:$0xff]
          %v931 = vld [vmem:[#allocation8 + $0x58] sm:$0xff]
          %v932 = vld [vmem:[#allocation8 + $0x60] sm:$0xff]
          %v933 = vld [vmem:[#allocation8 + $0x68] sm:$0xff]
          %v934 = vld [vmem:[#allocation8 + $0x70] sm:$0xff]
          %v935 = vld [vmem:[#allocation8 + $0x78] sm:$0xff]
          %v936 = vld [vmem:[#allocation8 + $0x80] sm:$0xff]
          %v937 = vld [vmem:[#allocation8 + $0x88] sm:$0xff]
          %v938 = vld [vmem:[#allocation8 + $0x90] sm:$0xff]
          %v939 = vld [vmem:[#allocation8 + $0x98] sm:$0xff]
          %v940 = vld [vmem:[#allocation8 + $0xa0] sm:$0xff]
          %v941 = vld [vmem:[#allocation8 + $0xa8] sm:$0xff]
          %v942 = vld [vmem:[#allocation8 + $0xb0] sm:$0xff]
          %v943 = vld [vmem:[#allocation8 + $0xb8] sm:$0xff]
          %v944 = vld [vmem:[#allocation8 + $0xc0] sm:$0xff]
          %v945 = vld [vmem:[#allocation8 + $0xc8] sm:$0xff]
          %v946 = vld [vmem:[#allocation8 + $0xd0] sm:$0xff]
          %v947 = vld [vmem:[#allocation8 + $0xd8] sm:$0xff]
          %v948 = vld [vmem:[#allocation8 + $0xe0] sm:$0xff]
          %v949 = vld [vmem:[#allocation8 + $0xe8] sm:$0xff]
          %v950 = vld [vmem:[#allocation8 + $0xf0] sm:$0xff]
          %v951 = vld [vmem:[#allocation8 + $0xf8] sm:$0xff]
          %v952 = vld [vmem:[%s4] sm:$0x3]
          %v954 = vlaneseq
          %v955 = vshrl.u32 %v954, 7
          %v956 = vsub.s32 0, %v955
          %v957 = vrot.slane %v952, %v956
          %v958 = vlaneseq
          %v959 = vshrl.u32 %v958, 7
          %v960 = vsub.s32 1, %v959
          %v961 = vrot.slane %v952, %v960
          %v996 = vunpack.c.l.b16 %v920
          %v997 = vunpack.c.h.b16 %v920
          %v998 = vunpack.c.l.b16 %v921
          %v999 = vunpack.c.h.b16 %v921
          %v1000 = vunpack.c.l.b16 %v922
          %v1001 = vunpack.c.h.b16 %v922
          %v1002 = vunpack.c.l.b16 %v923
          %v1003 = vunpack.c.h.b16 %v923
          %v1004 = vunpack.c.l.b16 %v924
          %v1005 = vunpack.c.h.b16 %v924
          %v1006 = vunpack.c.l.b16 %v925
          %v1007 = vunpack.c.h.b16 %v925
          %v1008 = vunpack.c.l.b16 %v926
          %v1009 = vunpack.c.h.b16 %v926
          %v1010 = vunpack.c.l.b16 %v927
          %v1011 = vunpack.c.h.b16 %v927
          %v1012 = vunpack.c.l.b16 %v928
          %v1013 = vunpack.c.h.b16 %v928
          %v1014 = vunpack.c.l.b16 %v929
          %v1015 = vunpack.c.h.b16 %v929
          %v1016 = vunpack.c.l.b16 %v930
          %v1017 = vunpack.c.h.b16 %v930
          %v1018 = vunpack.c.l.b16 %v931
          %v1019 = vunpack.c.h.b16 %v931
          %v1020 = vunpack.c.l.b16 %v932
          %v1021 = vunpack.c.h.b16 %v932
          %v1022 = vunpack.c.l.b16 %v933
          %v1023 = vunpack.c.h.b16 %v933
          %v1024 = vunpack.c.l.b16 %v934
          %v1025 = vunpack.c.h.b16 %v934
          %v1026 = vunpack.c.l.b16 %v935
          %v1027 = vunpack.c.h.b16 %v935
          %v1028 = vunpack.c.l.b16 %v936
          %v1029 = vunpack.c.h.b16 %v936
          %v1030 = vunpack.c.l.b16 %v937
          %v1031 = vunpack.c.h.b16 %v937
          %v1032 = vunpack.c.l.b16 %v938
          %v1033 = vunpack.c.h.b16 %v938
          %v1034 = vunpack.c.l.b16 %v939
          %v1035 = vunpack.c.h.b16 %v939
          %v1036 = vunpack.c.l.b16 %v940
          %v1037 = vunpack.c.h.b16 %v940
          %v1038 = vunpack.c.l.b16 %v941
          %v1039 = vunpack.c.h.b16 %v941
          %v1040 = vunpack.c.l.b16 %v942
          %v1041 = vunpack.c.h.b16 %v942
          %v1042 = vunpack.c.l.b16 %v943
          %v1043 = vunpack.c.h.b16 %v943
          %v1044 = vunpack.c.l.b16 %v944
          %v1045 = vunpack.c.h.b16 %v944
          %v1046 = vunpack.c.l.b16 %v945
          %v1047 = vunpack.c.h.b16 %v945
          %v1048 = vunpack.c.l.b16 %v946
          %v1049 = vunpack.c.h.b16 %v946
          %v1050 = vunpack.c.l.b16 %v947
          %v1051 = vunpack.c.h.b16 %v947
          %v1052 = vunpack.c.l.b16 %v948
          %v1053 = vunpack.c.h.b16 %v948
          %v1054 = vunpack.c.l.b16 %v949
          %v1055 = vunpack.c.h.b16 %v949
          %v1056 = vunpack.c.l.b16 %v950
          %v1057 = vunpack.c.h.b16 %v950
          %v1058 = vunpack.c.l.b16 %v951
          %v1059 = vunpack.c.h.b16 %v951
          %v1060 = vpack.c.b16 %v998, %v996
          %v1061 = vpack.c.b16 %v999, %v997
          %v1062 = vpack.c.b16 %v1002, %v1000
          %v1063 = vpack.c.b16 %v1003, %v1001
          %v1064 = vpack.c.b16 %v1006, %v1004
          %v1065 = vpack.c.b16 %v1007, %v1005
          %v1066 = vpack.c.b16 %v1010, %v1008
          %v1067 = vpack.c.b16 %v1011, %v1009
          %v1068 = vpack.c.b16 %v1014, %v1012
          %v1069 = vpack.c.b16 %v1015, %v1013
          %v1070 = vpack.c.b16 %v1018, %v1016
          %v1071 = vpack.c.b16 %v1019, %v1017
          %v1072 = vpack.c.b16 %v1022, %v1020
          %v1073 = vpack.c.b16 %v1023, %v1021
          %v1074 = vpack.c.b16 %v1026, %v1024
          %v1075 = vpack.c.b16 %v1027, %v1025
          %v1076 = vpack.c.b16 %v1030, %v1028
          %v1077 = vpack.c.b16 %v1031, %v1029
          %v1078 = vpack.c.b16 %v1034, %v1032
          %v1079 = vpack.c.b16 %v1035, %v1033
          %v1080 = vpack.c.b16 %v1038, %v1036
          %v1081 = vpack.c.b16 %v1039, %v1037
          %v1082 = vpack.c.b16 %v1042, %v1040
          %v1083 = vpack.c.b16 %v1043, %v1041
          %v1084 = vpack.c.b16 %v1046, %v1044
          %v1085 = vpack.c.b16 %v1047, %v1045
          %v1086 = vpack.c.b16 %v1050, %v1048
          %v1087 = vpack.c.b16 %v1051, %v1049
          %v1088 = vpack.c.b16 %v1054, %v1052
          %v1089 = vpack.c.b16 %v1055, %v1053
          %v1090 = vpack.c.b16 %v1058, %v1056
          %v1091 = vpack.c.b16 %v1059, %v1057
          %1124 = vmatprep.subr.bf16.mxu0 %v1061
          %1125 = vmatpush1.bf16.msra.mxu0 %v1060
          %1126 = vmatprep.subr.bf16.mxu0 %v1063
          %1127 = vmatpush1.bf16.msra.mxu0 %v1062
          %1128 = vmatprep.subr.bf16.mxu0 %v1065
          %1129 = vmatpush1.bf16.msra.mxu0 %v1064
          %1130 = vmatprep.subr.bf16.mxu0 %v1067
          %1131 = vmatpush1.bf16.msra.mxu0 %v1066
          %1132 = vmatprep.subr.bf16.mxu0 %v1069
          %1133 = vmatpush1.bf16.msra.mxu0 %v1068
          %1134 = vmatprep.subr.bf16.mxu0 %v1071
          %1135 = vmatpush1.bf16.msra.mxu0 %v1070
          %1136 = vmatprep.subr.bf16.mxu0 %v1073
          %1137 = vmatpush1.bf16.msra.mxu0 %v1072
          %1138 = vmatprep.subr.bf16.mxu0 %v1075
          %1139 = vmatpush1.bf16.msra.mxu0 %v1074
          %1140 = vmatprep.subr.bf16.mxu0 %v1077
          %1141 = vmatpush1.bf16.msra.mxu0 %v1076
          %1142 = vmatprep.subr.bf16.mxu0 %v1079
          %1143 = vmatpush1.bf16.msra.mxu0 %v1078
          %1144 = vmatprep.subr.bf16.mxu0 %v1081
          %1145 = vmatpush1.bf16.msra.mxu0 %v1080
          %1146 = vmatprep.subr.bf16.mxu0 %v1083
          %1147 = vmatpush1.bf16.msra.mxu0 %v1082
          %1148 = vmatprep.subr.bf16.mxu0 %v1085
          %1149 = vmatpush1.bf16.msra.mxu0 %v1084
          %1150 = vmatprep.subr.bf16.mxu0 %v1087
          %1151 = vmatpush1.bf16.msra.mxu0 %v1086
          %1152 = vmatprep.subr.bf16.mxu0 %v1089
          %1153 = vmatpush1.bf16.msra.mxu0 %v1088
          %1154 = vmatprep.subr.bf16.mxu0 %v1091
          %1155 = vmatpush1.bf16.msra.mxu0 %v1090
          %1156 = vmatprep.mubr.bf16.mxu0 %v905
          %1157 = vmatmul.mubr.bf16.gmra.mrb[0].mxu0 %v904
          %v1158 = vpop.f32.mrb[0].mxu0
          %v1159 = vadd.f32 %v957, %v1158
          %v1160 = vpop.f32.mrb[0].mxu0
          %v1161 = vadd.f32 %v961, %v1160
          %v1162 = vpop.f32.mrb[0].mxu0
          %v1163 = vadd.f32 %v957, %v1162
          %v1164 = vpop.f32.mrb[0].mxu0
          %v1165 = vadd.f32 %v961, %v1164
          %1166 = vmatprep.mubr.bf16.mxu0 %v907
          %1167 = vmatmul.mubr.bf16.gmra.mrb[0].mxu0 %v906
          %v1168 = vpop.f32.mrb[0].mxu0
          %v1169 = vadd.f32 %v957, %v1168
          %v1170 = vpop.f32.mrb[0].mxu0
          %v1171 = vadd.f32 %v961, %v1170
          %v1172 = vpop.f32.mrb[0].mxu0
          %v1173 = vadd.f32 %v957, %v1172
          %v1174 = vpop.f32.mrb[0].mxu0
          %v1175 = vadd.f32 %v961, %v1174
          %1176 = vmatprep.mubr.bf16.mxu0 %v909
          %1177 = vmatmul.mubr.bf16.gmra.mrb[0].mxu0 %v908
          %v1178 = vpop.f32.mrb[0].mxu0
          %v1179 = vadd.f32 %v957, %v1178
          %v1180 = vpop.f32.mrb[0].mxu0
          %v1181 = vadd.f32 %v961, %v1180
          %v1182 = vpop.f32.mrb[0].mxu0
          %v1183 = vadd.f32 %v957, %v1182
          %v1184 = vpop.f32.mrb[0].mxu0
          %v1185 = vadd.f32 %v961, %v1184
          %1186 = vmatprep.mubr.bf16.mxu0 %v911
          %1187 = vmatmul.mubr.bf16.gmra.mrb[0].mxu0 %v910
          %v1188 = vpop.f32.mrb[0].mxu0
          %v1189 = vadd.f32 %v957, %v1188
          %v1190 = vpop.f32.mrb[0].mxu0
          %v1191 = vadd.f32 %v961, %v1190
          %v1192 = vpop.f32.mrb[0].mxu0
          %v1193 = vadd.f32 %v957, %v1192
          %v1194 = vpop.f32.mrb[0].mxu0
          %v1195 = vadd.f32 %v961, %v1194
          %1196 = vmatprep.mubr.bf16.mxu0 %v913
          %1197 = vmatmul.mubr.bf16.gmra.mrb[0].mxu0 %v912
          %v1198 = vpop.f32.mrb[0].mxu0
          %v1199 = vadd.f32 %v957, %v1198
          %v1200 = vpop.f32.mrb[0].mxu0
          %v1201 = vadd.f32 %v961, %v1200
          %v1202 = vpop.f32.mrb[0].mxu0
          %v1203 = vadd.f32 %v957, %v1202
          %v1204 = vpop.f32.mrb[0].mxu0
          %v1205 = vadd.f32 %v961, %v1204
          %1206 = vmatprep.mubr.bf16.mxu0 %v915
          %1207 = vmatmul.mubr.bf16.gmra.mrb[0].mxu0 %v914
          %v1208 = vpop.f32.mrb[0].mxu0
          %v1209 = vadd.f32 %v957, %v1208
          %v1210 = vpop.f32.mrb[0].mxu0
          %v1211 = vadd.f32 %v961, %v1210
          %v1212 = vpop.f32.mrb[0].mxu0
          %v1213 = vadd.f32 %v957, %v1212
          %v1214 = vpop.f32.mrb[0].mxu0
          %v1215 = vadd.f32 %v961, %v1214
          %1216 = vmatprep.mubr.bf16.mxu0 %v917
          %1217 = vmatmul.mubr.bf16.gmra.mrb[0].mxu0 %v916
          %v1218 = vpop.f32.mrb[0].mxu0
          %v1219 = vadd.f32 %v957, %v1218
          %v1220 = vpop.f32.mrb[0].mxu0
          %v1221 = vadd.f32 %v961, %v1220
          %v1222 = vpop.f32.mrb[0].mxu0
          %v1223 = vadd.f32 %v957, %v1222
          %v1224 = vpop.f32.mrb[0].mxu0
          %v1225 = vadd.f32 %v961, %v1224
          %1226 = vmatprep.mubr.bf16.mxu0 %v919
          %1227 = vmatmul.mubr.bf16.gmra.mrb[0].mxu0 %v918
          %v1228 = vpop.f32.mrb[0].mxu0
          %v1229 = vadd.f32 %v957, %v1228
          %v1230 = vpop.f32.mrb[0].mxu0
          %v1231 = vadd.f32 %v961, %v1230
          %v1232 = vpop.f32.mrb[0].mxu0
          %v1233 = vadd.f32 %v957, %v1232
          %v1234 = vpop.f32.mrb[0].mxu0
          %v1235 = vadd.f32 %v961, %v1234
          %1236 = vdwg.mxu0
          %v1237 = vmax.f32 %v1159, 0.0
          %v1238 = vmax.f32 %v1161, 0.0
          %v1239 = vmax.f32 %v1163, 0.0
          %v1240 = vmax.f32 %v1165, 0.0
          %v1241 = vmax.f32 %v1169, 0.0
          %v1242 = vmax.f32 %v1171, 0.0
          %v1243 = vmax.f32 %v1173, 0.0
          %v1244 = vmax.f32 %v1175, 0.0
          %v1245 = vmax.f32 %v1179, 0.0
          %v1246 = vmax.f32 %v1181, 0.0
          %v1247 = vmax.f32 %v1183, 0.0
          %v1248 = vmax.f32 %v1185, 0.0
          %v1249 = vmax.f32 %v1189, 0.0
          %v1250 = vmax.f32 %v1191, 0.0
          %v1251 = vmax.f32 %v1193, 0.0
          %v1252 = vmax.f32 %v1195, 0.0
          %v1253 = vmax.f32 %v1199, 0.0
          %v1254 = vmax.f32 %v1201, 0.0
          %v1255 = vmax.f32 %v1203, 0.0
          %v1256 = vmax.f32 %v1205, 0.0
          %v1257 = vmax.f32 %v1209, 0.0
          %v1258 = vmax.f32 %v1211, 0.0
          %v1259 = vmax.f32 %v1213, 0.0
          %v1260 = vmax.f32 %v1215, 0.0
          %v1261 = vmax.f32 %v1219, 0.0
          %v1262 = vmax.f32 %v1221, 0.0
          %v1263 = vmax.f32 %v1223, 0.0
          %v1264 = vmax.f32 %v1225, 0.0
          %v1265 = vmax.f32 %v1229, 0.0
          %v1266 = vmax.f32 %v1231, 0.0
          %v1267 = vmax.f32 %v1233, 0.0
          %v1268 = vmax.f32 %v1235, 0.0
          %v1269 = vpack.c.bf16 %v1239, %v1237
          %v1270 = vpack.c.bf16 %v1240, %v1238
          %v1271 = vpack.c.bf16 %v1243, %v1241
          %v1272 = vpack.c.bf16 %v1244, %v1242
          %v1273 = vpack.c.bf16 %v1247, %v1245
          %v1274 = vpack.c.bf16 %v1248, %v1246
          %v1275 = vpack.c.bf16 %v1251, %v1249
          %v1276 = vpack.c.bf16 %v1252, %v1250
          %v1277 = vpack.c.bf16 %v1255, %v1253
          %v1278 = vpack.c.bf16 %v1256, %v1254
          %v1279 = vpack.c.bf16 %v1259, %v1257
          %v1280 = vpack.c.bf16 %v1260, %v1258
          %v1281 = vpack.c.bf16 %v1263, %v1261
          %v1282 = vpack.c.bf16 %v1264, %v1262
          %v1283 = vpack.c.bf16 %v1267, %v1265
          %v1284 = vpack.c.bf16 %v1268, %v1266
          %v1285 = vld [vmem:[#allocation9] sm:$0xf]
          %v1286 = vld [vmem:[#allocation9 + $0x4] sm:$0xf]
          %v1287 = vld [vmem:[#allocation9 + $0x8] sm:$0xf]
          %v1288 = vld [vmem:[#allocation9 + $0xc] sm:$0xf]
          %v1289 = vld [vmem:[#allocation9 + $0x10] sm:$0xf]
          %v1290 = vld [vmem:[#allocation9 + $0x14] sm:$0xf]
          %v1291 = vld [vmem:[#allocation9 + $0x18] sm:$0xf]
          %v1292 = vld [vmem:[#allocation9 + $0x1c] sm:$0xf]
          %v1293 = vld [vmem:[#allocation9 + $0x20] sm:$0xf]
          %v1294 = vld [vmem:[#allocation9 + $0x24] sm:$0xf]
          %v1295 = vld [vmem:[#allocation9 + $0x28] sm:$0xf]
          %v1296 = vld [vmem:[#allocation9 + $0x2c] sm:$0xf]
          %v1297 = vld [vmem:[#allocation9 + $0x30] sm:$0xf]
          %v1298 = vld [vmem:[#allocation9 + $0x34] sm:$0xf]
          %v1299 = vld [vmem:[#allocation9 + $0x38] sm:$0xf]
          %v1300 = vld [vmem:[#allocation9 + $0x3c] sm:$0xf]
          %v1301 = vld [vmem:[#allocation9 + $0x40] sm:$0xf]
          %v1302 = vld [vmem:[#allocation9 + $0x44] sm:$0xf]
          %v1303 = vld [vmem:[#allocation9 + $0x48] sm:$0xf]
          %v1304 = vld [vmem:[#allocation9 + $0x4c] sm:$0xf]
          %v1305 = vld [vmem:[#allocation9 + $0x50] sm:$0xf]
          %v1306 = vld [vmem:[#allocation9 + $0x54] sm:$0xf]
          %v1307 = vld [vmem:[#allocation9 + $0x58] sm:$0xf]
          %v1308 = vld [vmem:[#allocation9 + $0x5c] sm:$0xf]
          %v1309 = vld [vmem:[#allocation9 + $0x60] sm:$0xf]
          %v1310 = vld [vmem:[#allocation9 + $0x64] sm:$0xf]
          %v1311 = vld [vmem:[#allocation9 + $0x68] sm:$0xf]
          %v1312 = vld [vmem:[#allocation9 + $0x6c] sm:$0xf]
          %v1313 = vld [vmem:[#allocation9 + $0x70] sm:$0xf]
          %v1314 = vld [vmem:[#allocation9 + $0x74] sm:$0xf]
          %v1315 = vld [vmem:[#allocation9 + $0x78] sm:$0xf]
          %v1316 = vld [vmem:[#allocation9 + $0x7c] sm:$0xf]
          %v1317 = vld [vmem:[%s6] sm:$0x1]
          %v1319 = vlaneseq
          %v1320 = vshrl.u32 %v1319, 7
          %v1321 = vsub.s32 0, %v1320
          %v1322 = vrot.slane %v1317, %v1321
          %v1356 = vunpack.c.l.b16 %v1285
          %v1357 = vunpack.c.l.b16 %v1286
          %v1358 = vunpack.c.l.b16 %v1287
          %v1359 = vunpack.c.l.b16 %v1288
          %v1360 = vunpack.c.l.b16 %v1289
          %v1361 = vunpack.c.l.b16 %v1290
          %v1362 = vunpack.c.l.b16 %v1291
          %v1363 = vunpack.c.l.b16 %v1292
          %v1364 = vunpack.c.l.b16 %v1293
          %v1365 = vunpack.c.l.b16 %v1294
          %v1366 = vunpack.c.l.b16 %v1295
          %v1367 = vunpack.c.l.b16 %v1296
          %v1368 = vunpack.c.l.b16 %v1297
          %v1369 = vunpack.c.l.b16 %v1298
          %v1370 = vunpack.c.l.b16 %v1299
          %v1371 = vunpack.c.l.b16 %v1300
          %v1372 = vunpack.c.l.b16 %v1301
          %v1373 = vunpack.c.l.b16 %v1302
          %v1374 = vunpack.c.l.b16 %v1303
          %v1375 = vunpack.c.l.b16 %v1304
          %v1376 = vunpack.c.l.b16 %v1305
          %v1377 = vunpack.c.l.b16 %v1306
          %v1378 = vunpack.c.l.b16 %v1307
          %v1379 = vunpack.c.l.b16 %v1308
          %v1380 = vunpack.c.l.b16 %v1309
          %v1381 = vunpack.c.l.b16 %v1310
          %v1382 = vunpack.c.l.b16 %v1311
          %v1383 = vunpack.c.l.b16 %v1312
          %v1384 = vunpack.c.l.b16 %v1313
          %v1385 = vunpack.c.l.b16 %v1314
          %v1386 = vunpack.c.l.b16 %v1315
          %v1387 = vunpack.c.l.b16 %v1316
          %v1388 = vpack.c.b16 %v1357, %v1356
          %v1389 = vpack.c.b16 %v1359, %v1358
          %v1390 = vpack.c.b16 %v1361, %v1360
          %v1391 = vpack.c.b16 %v1363, %v1362
          %v1392 = vpack.c.b16 %v1365, %v1364
          %v1393 = vpack.c.b16 %v1367, %v1366
          %v1394 = vpack.c.b16 %v1369, %v1368
          %v1395 = vpack.c.b16 %v1371, %v1370
          %v1396 = vpack.c.b16 %v1373, %v1372
          %v1397 = vpack.c.b16 %v1375, %v1374
          %v1398 = vpack.c.b16 %v1377, %v1376
          %v1399 = vpack.c.b16 %v1379, %v1378
          %v1400 = vpack.c.b16 %v1381, %v1380
          %v1401 = vpack.c.b16 %v1383, %v1382
          %v1402 = vpack.c.b16 %v1385, %v1384
          %v1403 = vpack.c.b16 %v1387, %v1386
          %1420 = vmatprep.subr.bf16.mxu0 0
          %1421 = vmatpush1.bf16.msra.mxu0 %v1388
          %1422 = vmatprep.subr.bf16.mxu0 0
          %1423 = vmatpush1.bf16.msra.mxu0 %v1389
          %1424 = vmatprep.subr.bf16.mxu0 0
          %1425 = vmatpush1.bf16.msra.mxu0 %v1390
          %1426 = vmatprep.subr.bf16.mxu0 0
          %1427 = vmatpush1.bf16.msra.mxu0 %v1391
          %1428 = vmatprep.subr.bf16.mxu0 0
          %1429 = vmatpush1.bf16.msra.mxu0 %v1392
          %1430 = vmatprep.subr.bf16.mxu0 0
          %1431 = vmatpush1.bf16.msra.mxu0 %v1393
          %1432 = vmatprep.subr.bf16.mxu0 0
          %1433 = vmatpush1.bf16.msra.mxu0 %v1394
          %1434 = vmatprep.subr.bf16.mxu0 0
          %1435 = vmatpush1.bf16.msra.mxu0 %v1395
          %1436 = vmatprep.subr.bf16.mxu0 0
          %1437 = vmatpush1.bf16.msra.mxu0 %v1396
          %1438 = vmatprep.subr.bf16.mxu0 0
          %1439 = vmatpush1.bf16.msra.mxu0 %v1397
          %1440 = vmatprep.subr.bf16.mxu0 0
          %1441 = vmatpush1.bf16.msra.mxu0 %v1398
          %1442 = vmatprep.subr.bf16.mxu0 0
          %1443 = vmatpush1.bf16.msra.mxu0 %v1399
          %1444 = vmatprep.subr.bf16.mxu0 0
          %1445 = vmatpush1.bf16.msra.mxu0 %v1400
          %1446 = vmatprep.subr.bf16.mxu0 0
          %1447 = vmatpush1.bf16.msra.mxu0 %v1401
          %1448 = vmatprep.subr.bf16.mxu0 0
          %1449 = vmatpush1.bf16.msra.mxu0 %v1402
          %1450 = vmatprep.subr.bf16.mxu0 0
          %1451 = vmatpush1.bf16.msra.mxu0 %v1403
          %1452 = vmatprep.mubr.bf16.mxu0 %v1270
          %1453 = vmatmul.mubr.bf16.gmra.mrb[0].mxu0 %v1269
          %v1454 = vpop.f32.mrb[0].mxu0
          %v1455 = vadd.f32 %v1322, %v1454
          %v1456 = vpop.f32.mrb[0].mxu0
          %v1457 = vpop.f32.mrb[0].mxu0
          %v1458 = vadd.f32 %v1322, %v1457
          %v1459 = vpop.f32.mrb[0].mxu0
          %1460 = vmatprep.mubr.bf16.mxu0 %v1272
          %1461 = vmatmul.mubr.bf16.gmra.mrb[0].mxu0 %v1271
          %v1462 = vpop.f32.mrb[0].mxu0
          %v1463 = vadd.f32 %v1322, %v1462
          %v1464 = vpop.f32.mrb[0].mxu0
          %v1465 = vpop.f32.mrb[0].mxu0
          %v1466 = vadd.f32 %v1322, %v1465
          %v1467 = vpop.f32.mrb[0].mxu0
          %1468 = vmatprep.mubr.bf16.mxu0 %v1274
          %1469 = vmatmul.mubr.bf16.gmra.mrb[0].mxu0 %v1273
          %v1470 = vpop.f32.mrb[0].mxu0
          %v1471 = vadd.f32 %v1322, %v1470
          %v1472 = vpop.f32.mrb[0].mxu0
          %v1473 = vpop.f32.mrb[0].mxu0
          %v1474 = vadd.f32 %v1322, %v1473
          %v1475 = vpop.f32.mrb[0].mxu0
          %1476 = vmatprep.mubr.bf16.mxu0 %v1276
          %1477 = vmatmul.mubr.bf16.gmra.mrb[0].mxu0 %v1275
          %v1478 = vpop.f32.mrb[0].mxu0
          %v1479 = vadd.f32 %v1322, %v1478
          %v1480 = vpop.f32.mrb[0].mxu0
          %v1481 = vpop.f32.mrb[0].mxu0
          %v1482 = vadd.f32 %v1322, %v1481
          %v1483 = vpop.f32.mrb[0].mxu0
          %1484 = vmatprep.mubr.bf16.mxu0 %v1278
          %1485 = vmatmul.mubr.bf16.gmra.mrb[0].mxu0 %v1277
          %v1486 = vpop.f32.mrb[0].mxu0
          %v1487 = vadd.f32 %v1322, %v1486
          %v1488 = vpop.f32.mrb[0].mxu0
          %v1489 = vpop.f32.mrb[0].mxu0
          %v1490 = vadd.f32 %v1322, %v1489
          %v1491 = vpop.f32.mrb[0].mxu0
          %1492 = vmatprep.mubr.bf16.mxu0 %v1280
          %1493 = vmatmul.mubr.bf16.gmra.mrb[0].mxu0 %v1279
          %v1494 = vpop.f32.mrb[0].mxu0
          %v1495 = vadd.f32 %v1322, %v1494
          %v1496 = vpop.f32.mrb[0].mxu0
          %v1497 = vpop.f32.mrb[0].mxu0
          %v1498 = vadd.f32 %v1322, %v1497
          %v1499 = vpop.f32.mrb[0].mxu0
          %1500 = vmatprep.mubr.bf16.mxu0 %v1282
          %1501 = vmatmul.mubr.bf16.gmra.mrb[0].mxu0 %v1281
          %v1502 = vpop.f32.mrb[0].mxu0
          %v1503 = vadd.f32 %v1322, %v1502
          %v1504 = vpop.f32.mrb[0].mxu0
          %v1505 = vpop.f32.mrb[0].mxu0
          %v1506 = vadd.f32 %v1322, %v1505
          %v1507 = vpop.f32.mrb[0].mxu0
          %1508 = vmatprep.mubr.bf16.mxu0 %v1284
          %1509 = vmatmul.mubr.bf16.gmra.mrb[0].mxu0 %v1283
          %v1510 = vpop.f32.mrb[0].mxu0
          %v1511 = vadd.f32 %v1322, %v1510
          %v1512 = vpop.f32.mrb[0].mxu0
          %v1513 = vpop.f32.mrb[0].mxu0
          %v1514 = vadd.f32 %v1322, %v1513
          %v1515 = vpop.f32.mrb[0].mxu0
          %1516 = vdwg.mxu0
          %1517 = vst [vmem:[%s382] sm:$0xff] %v1455
          %1518 = vst [vmem:[%s382 + $0x8] sm:$0xff] %v1458
          %1519 = vst [vmem:[%s382 + $0x10] sm:$0xff] %v1463
          %1520 = vst [vmem:[%s382 + $0x18] sm:$0xff] %v1466
          %1521 = vst [vmem:[%s382 + $0x20] sm:$0xff] %v1471
          %1522 = vst [vmem:[%s382 + $0x28] sm:$0xff] %v1474
          %1523 = vst [vmem:[%s382 + $0x30] sm:$0xff] %v1479
          %1524 = vst [vmem:[%s382 + $0x38] sm:$0xff] %v1482
          %1525 = vst [vmem:[%s382 + $0x40] sm:$0xff] %v1487
          %1526 = vst [vmem:[%s382 + $0x48] sm:$0xff] %v1490
          %1527 = vst [vmem:[%s382 + $0x50] sm:$0xff] %v1495
          %1528 = vst [vmem:[%s382 + $0x58] sm:$0xff] %v1498
          %1529 = vst [vmem:[%s382 + $0x60] sm:$0xff] %v1503
          %1530 = vst [vmem:[%s382 + $0x68] sm:$0xff] %v1506
          %1531 = vst [vmem:[%s382 + $0x70] sm:$0xff] %v1511
          %1532 = vst [vmem:[%s382 + $0x78] sm:$0xff] %v1514
        $region72: #{tpu_custom_call.1} parent=47 // pred_fallthru
          _
        %s1533 = sand.u32 %s207, 1
        %s1534 = scalar_lea.sflag [#allocation5], %s1533
        %s1535 = sand.u32 %s207, 1
        %s1536 = smul.addr %s1535, 128
        %s1537 = scalar_lea.vmem [#allocation11], %s1536
        // Predicated region
        $region73: #{tpu_custom_call.1} parent=47 // pred_check
          %p1538 = pneg %p217
        $region74: #{tpu_custom_call.1} parent=47 // pred_check_branch
          %1540 = sbr.rel (%p1538) target = $region76
        $region75: #{tpu_custom_call.1} parent=47 // pred_region
          %s1541 = smul.u32 16, %s32
          %s1543 = ssub.s32 2048, 2048
          %1544 = vsyncadd %s1534, %s1543
          %s1545 = smul.addr %s1541, 128
          %s1546 = scalar_lea.hbm %s7, %s1545
          %s1547 = sshll.u32 %s1537, 4
          %s1548 = int_to_ptr.vmem [resolvable:$true] %s1547
          %1553 = dma.vmem_to_hbm [thread:$0]  %s1548, 2048, %s1546, %s1534, 128, 128, 8
        $region76: #{tpu_custom_call.1} parent=47 // pred_fallthru
          _
      $region48: #{tpu_custom_call.1} parent=5 // pred_fallthru
        _
      %p1554 = scmp.le.s32.totalorder 2, %s23
      // Predicated region
      $region77: #{tpu_custom_call.1} parent=5 // pred_check
        %p1555 = pneg %p1554
      $region78: #{tpu_custom_call.1} parent=5 // pred_check_branch
        %1557 = sbr.rel (%p1555) target = $region80
      $region79: #{tpu_custom_call.1} parent=5 // pred_region
        %s1558 = ssub.s32 %s23, 2
        // Predicated region
        $region81: #{tpu_custom_call.1} parent=79 // pred_check
          %p1559 = pneg %p223
        $region82: #{tpu_custom_call.1} parent=79 // pred_check_branch
          %1561 = sbr.rel (%p1559) target = $region84
        $region83: #{tpu_custom_call.1} parent=79 // pred_region
          %s1562 = sand.u32 %s208, 1
          %s1563 = scalar_lea.sflag [#allocation5], %s1562
          %s1564 = sand.u32 %s208, 1
          %s1565 = smul.addr %s1564, 128
          %s1566 = scalar_lea.vmem [#allocation11], %s1565
          %1567 = dma.done %s1563, 2048
        $region84: #{tpu_custom_call.1} parent=79 // pred_fallthru
          _
      $region80: #{tpu_custom_call.1} parent=5 // pred_fallthru
        _
    $region6: #{tpu_custom_call.1} parent=1 // loop_footer
      %s27 = sadd.s32 1, %s23
    $region7: #{tpu_custom_call.1} parent=1 // loop_footer_branch
      %22 = sbr.rel target = $region3
    $region8: #{tpu_custom_call.1} parent=1 // loop_exit
      _
    %1568 = vsyncpa [#allocation4], 1
    %s1569 = scalar_lea.sflag [#allocation4], 1
    %1570 = vsyncpa %s1569, 1
    %1571 = vsyncpa [#allocation7], 1
    %s1572 = scalar_lea.sflag [#allocation7], 1
    %1573 = vsyncpa %s1572, 1
    %1574 = vsyncpa [#allocation10], 1
    %1575 = vsyncpa [#allocation5], 1
    %s1576 = scalar_lea.sflag [#allocation5], 1
    %1577 = vsyncpa %s1576, 1

</llo_original>
